<compile_context>
chip_gen: v7x
topology: tpu7x:2x2x1
jax: 0.10.0
libtpu: 0.0.40
codegen_flags: <defaults>
</compile_context>

<pallas_src>
import functools

import jax
import jax.numpy as jnp
from jax.experimental import pallas as pl
from jax.experimental.pallas import tpu as pltpu


def _gat_row_kernel(x_tile_ref, x_full_ref, adj_ref, w_ref, a12_ref, o_ref, *,
                    alpha, n_heads, f_hid, concat):
    """One row-tile of queries, all H heads fused."""
    f32 = jnp.float32
    x_tile = x_tile_ref[...]      # (tq, F_in)   query rows of this grid step
    x_full = x_full_ref[...]      # (N,  F_in)   all nodes (keys / values)
    adj = adj_ref[...]            # (tq, N)      adjacency rows for the tile
    w = w_ref[...]                # (F_in, H*F_hid)
    a12 = a12_ref[...]            # (H*F_hid, 2H)  [a1_blk | a2_blk] block-diag

    # Single projection contraction (no duplicate transposed matmul).
    h_tile = jnp.dot(x_tile, w, preferred_element_type=f32)       # (tq, H*F_hid)
    h_full = jnp.dot(x_full, w, preferred_element_type=f32)       # (N,  H*F_hid)

    # Fused attention-logit dot: one MXU push yields the query half (e1) and the
    # key half (e2) for every head.
    e12_tile = jnp.dot(h_tile, a12, preferred_element_type=f32)   # (tq, 2H)
    e12_full = jnp.dot(h_full, a12, preferred_element_type=f32)   # (N, 2H)
    e1 = e12_tile[:, :n_heads]                                     # (tq, H)
    e2_t = e12_full[:, n_heads:].T                                 # (H, N) tiny XLU transpose

    head_outs = []
    for hd in range(n_heads):                  # static, unrolled (H is small)
        # e[i, j] = leakyrelu(e1[i] + e2[j])
        e = e1[:, hd:hd + 1] + e2_t[hd:hd + 1, :]                  # (tq, N)
        e = jnp.where(e > 0, e, alpha * e)                         # LeakyReLU(alpha)

        # Mask non-edges with 9e-15 (NOT -inf), exactly as the reference module.
        att = jnp.where(adj > 0, e, f32(9e-15))

        # Row-wise softmax (dim=1).
        m = jnp.max(att, axis=1, keepdims=True)
        p = jnp.exp(att - m)
        denom = jnp.sum(p, axis=1, keepdims=True)
        r = pl.reciprocal(denom, approx=True)                      # EUP seed
        r = r * (2.0 - denom * r)                                  # Newton step -> f32 prec
        att = p * r

        # h' = att @ h_head, then optional ELU (concat=True path).
        hp = jnp.dot(att, h_full[:, hd * f_hid:(hd + 1) * f_hid],
                     preferred_element_type=f32)                   # (tq, F_hid)
        if concat:
            # Clamp the exp argument: the positive branch is discarded by where,
            # but unclamped exp(large) would overflow to inf.
            hp = jnp.where(hp > 0, hp, jnp.exp(jnp.minimum(hp, 0.0)) - 1.0)

        if f_hid % 128 == 0:
            # 128-lane-aligned slice: store each head directly (no concat pressure).
            o_ref[:, hd * f_hid:(hd + 1) * f_hid] = hp.astype(o_ref.dtype)
        else:
            head_outs.append(hp)

    if f_hid % 128 != 0:
        # Single lane-dense (tq, H*F_hid) full-width store (no masked partial vst).
        o_ref[...] = jnp.concatenate(head_outs, axis=1).astype(o_ref.dtype)


def _pick_row_tile(n, target=256):
    """Largest row tile <= target that divides N (multiple of 8); else full N."""
    if n <= target:
        return n
    start = target - (target % 8)
    for cand in range(start, 7, -8):
        if n % cand == 0:
            return cand
    return n


def gat_forward(x, adj, W, a, *, alpha=0.2, concat=True, tq=None):
    """Multi-head GAT forward.

    x:   (N, F_in) float32
    adj: (N, N)    float32
    W:   (H, F_in, F_hid) float32
    a:   (H, 2*F_hid, 1)  float32
    returns (N, H * F_hid) float32  (torch.cat of the per-head outputs along dim=1)
    """
    N, F_in = x.shape
    H, _, F_hid = W.shape
    HF = H * F_hid

    if tq is None:
        tq = _pick_row_tile(N)
    assert N % tq == 0 and (tq == N or tq % 8 == 0), (N, tq)

    # Per-head weights laid out so head hd occupies columns [hd*F_hid, (hd+1)*F_hid).
    w_flat = jnp.transpose(W, (1, 0, 2)).reshape(F_in, HF)        # (F_in, H*F_hid)

    # Block-diagonal attention vectors, fused as [a1 | a2]: one MXU dot on the
    # projected features yields both logit halves for every head.
    a1 = a[:, :F_hid, 0]                                          # (H, F_hid)
    a2 = a[:, F_hid:, 0]                                          # (H, F_hid)
    eye = jnp.eye(H, dtype=jnp.float32)
    a1_blk = (a1[:, :, None] * eye[:, None, :]).reshape(HF, H)    # (H*F_hid, H)
    a2_blk = (a2[:, :, None] * eye[:, None, :]).reshape(HF, H)    # (H*F_hid, H)
    a12_blk = jnp.concatenate([a1_blk, a2_blk], axis=1)           # (H*F_hid, 2H)

    kernel = functools.partial(_gat_row_kernel, alpha=float(alpha),
                               n_heads=H, f_hid=F_hid, concat=concat)

    out = pl.pallas_call(
        kernel,
        out_shape=jax.ShapeDtypeStruct((N, HF), jnp.float32),
        grid_spec=pltpu.PrefetchScalarGridSpec(
            num_scalar_prefetch=0,
            grid=(N // tq,),
            in_specs=[
                pl.BlockSpec((tq, F_in), lambda i: (i, 0)),   # query rows of x
                pl.BlockSpec((N, F_in), lambda i: (0, 0)),    # full x (keys / values)
                pl.BlockSpec((tq, N), lambda i: (i, 0)),      # adjacency row tile
                pl.BlockSpec((F_in, HF), lambda i: (0, 0)),   # W (tiny, resident)
                pl.BlockSpec((HF, 2 * H), lambda i: (0, 0)),  # [a1 | a2] block-diag
            ],
            out_specs=pl.BlockSpec((tq, HF), lambda i: (i, 0)),
        ),
        compiler_params=pltpu.CompilerParams(
            # Row tiles are independent -> megacore-parallel (2nd TC on v7x).
            dimension_semantics=("parallel",),
        ),
    )(x, x, adj, w_flat, a12_blk)
    return out


def gat_reference(x, adj, W, a, *, alpha=0.2, concat=True):
    """Pure-JAX reference mirroring the PyTorch module (dropout=0)."""
    H, _, F_hid = W.shape
    outs = []
    for h_idx in range(H):
        h = x @ W[h_idx]                                  # (N, F_hid)
        a1 = a[h_idx, :F_hid, 0]
        a2 = a[h_idx, F_hid:, 0]
        e = (h @ a1)[:, None] + (h @ a2)[None, :]
        e = jnp.where(e > 0, e, alpha * e)
        att = jnp.where(adj > 0, e, 9e-15)
        att = jax.nn.softmax(att, axis=1)
        hp = att @ h
        outs.append(jax.nn.elu(hp) if concat else hp)
    return jnp.concatenate(outs, axis=1)


def xavier_uniform(key, shape, gain):
    fan_in, fan_out = shape[-2], shape[-1]
    bound = gain * jnp.sqrt(6.0 / (fan_in + fan_out))
    return jax.random.uniform(key, shape, jnp.float32, -bound, bound)


if __name__ == "__main__":
    # Small config consistent with the module: nfeat -> nhid per head, nheads heads.
    N = 128       # number of graph nodes (2 row tiles -> exercises the grid)
    nfeat = 16
    nhid = 32
    nheads = 4
    alpha = 0.2   # LeakyReLU negative slope
    gain = jnp.sqrt(2.0)

    key = jax.random.PRNGKey(0)
    kx, kadj, kw, ka = jax.random.split(key, 4)

    x = jax.random.normal(kx, (N, nfeat), jnp.float32)
    # sparse-ish binary adjacency with self loops
    adj_rand = jax.random.uniform(kadj, (N, N), jnp.float32)
    adj = (adj_rand > 0.8).astype(jnp.float32)
    adj = jnp.maximum(adj, jnp.eye(N, dtype=jnp.float32))

    # Per-head parameters (xavier_uniform with gain sqrt(2), deterministic).
    W = xavier_uniform(kw, (nheads, nfeat, nhid), gain)          # (H, F_in, F_hid)
    a = xavier_uniform(ka, (nheads, 2 * nhid, 1), gain)          # (H, 2*F_hid, 1)

    out = gat_forward(x, adj, W, a, alpha=alpha, concat=True, tq=64)
    out = jax.block_until_ready(out)

    ref = gat_reference(x, adj, W, a, alpha=alpha, concat=True)
    assert out.shape == (N, nheads * nhid), out.shape
    assert jnp.allclose(out, ref, atol=1e-5, rtol=1e-5), (
        float(jnp.max(jnp.abs(out - ref)))
    )

    print("KERNEL_OK")
</pallas_src>

<mosaic_0001>
module attributes {stable_mosaic.version = 11 : i64} {
  func.func @_gat_row_kernel(%arg0: i32, %arg1: memref<64x16xf32, #tpu.memory_space<vmem>>, %arg2: memref<128x16xf32, #tpu.memory_space<vmem>>, %arg3: memref<64x128xf32, #tpu.memory_space<vmem>>, %arg4: memref<16x128xf32, #tpu.memory_space<vmem>>, %arg5: memref<128x8xf32, #tpu.memory_space<vmem>>, %arg6: memref<64x128xf32, #tpu.memory_space<vmem>>) attributes {dimension_semantics = [#tpu.dimension_semantics<parallel>], iteration_bounds = array<i64: 2>, scalar_prefetch = 0 : i64, scratch_operands = 0 : i64, tpu.core_type = #tpu.core_type<tc>, window_params = [{transform_indices = @transform_0, window_bounds = array<i64: 64, 16>}, {pipeline_mode = #tpu.pipeline_mode<synchronous>, transform_indices = @transform_1, window_bounds = array<i64: 128, 16>}, {transform_indices = @transform_2, window_bounds = array<i64: 64, 128>}, {pipeline_mode = #tpu.pipeline_mode<synchronous>, transform_indices = @transform_3, window_bounds = array<i64: 16, 128>}, {pipeline_mode = #tpu.pipeline_mode<synchronous>, transform_indices = @transform_4, window_bounds = array<i64: 128, 8>}, {transform_indices = @transform_5, window_bounds = array<i64: 64, 128>}]} {
    %c0 = arith.constant 0 : index
    %c0_0 = arith.constant 0 : index
    %0 = vector.load %arg1[%c0, %c0_0] : memref<64x16xf32, #tpu.memory_space<vmem>>, vector<64x16xf32>
    %c0_1 = arith.constant 0 : index
    %c0_2 = arith.constant 0 : index
    %1 = vector.load %arg2[%c0_1, %c0_2] : memref<128x16xf32, #tpu.memory_space<vmem>>, vector<128x16xf32>
    %c0_3 = arith.constant 0 : index
    %c0_4 = arith.constant 0 : index
    %2 = vector.load %arg3[%c0_3, %c0_4] : memref<64x128xf32, #tpu.memory_space<vmem>>, vector<64x128xf32>
    %c0_5 = arith.constant 0 : index
    %c0_6 = arith.constant 0 : index
    %3 = vector.load %arg4[%c0_5, %c0_6] : memref<16x128xf32, #tpu.memory_space<vmem>>, vector<16x128xf32>
    %c0_7 = arith.constant 0 : index
    %c0_8 = arith.constant 0 : index
    %4 = vector.load %arg5[%c0_7, %c0_8] : memref<128x8xf32, #tpu.memory_space<vmem>>, vector<128x8xf32>
    %cst = arith.constant dense<0.000000e+00> : vector<64x128xf32>
    %5 = tpu.matmul %0, %3, %cst {dimension_numbers = #tpu.dot_dimension_numbers<[1], [0], [0], [1], [0, 0, 1, 1], [], []>} : vector<64x16xf32>, vector<16x128xf32>, vector<64x128xf32> -> vector<64x128xf32>
    %cst_9 = arith.constant dense<0.000000e+00> : vector<128x128xf32>
    %6 = tpu.matmul %1, %3, %cst_9 {dimension_numbers = #tpu.dot_dimension_numbers<[1], [0], [0], [1], [0, 0, 1, 1], [], []>} : vector<128x16xf32>, vector<16x128xf32>, vector<128x128xf32> -> vector<128x128xf32>
    %cst_10 = arith.constant dense<0.000000e+00> : vector<64x8xf32>
    %7 = tpu.matmul %5, %4, %cst_10 {dimension_numbers = #tpu.dot_dimension_numbers<[1], [0], [0], [1], [0, 0, 1, 1], [], []>} : vector<64x128xf32>, vector<128x8xf32>, vector<64x8xf32> -> vector<64x8xf32>
    %cst_11 = arith.constant dense<0.000000e+00> : vector<128x8xf32>
    %8 = tpu.matmul %6, %4, %cst_11 {dimension_numbers = #tpu.dot_dimension_numbers<[1], [0], [0], [1], [0, 0, 1, 1], [], []>} : vector<128x128xf32>, vector<128x8xf32>, vector<128x8xf32> -> vector<128x8xf32>
    %9 = vector.extract_strided_slice %7 {offsets = [0, 0], sizes = [64, 4], strides = [1, 1]} : vector<64x8xf32> to vector<64x4xf32>
    %10 = vector.extract_strided_slice %8 {offsets = [0, 4], sizes = [128, 4], strides = [1, 1]} : vector<128x8xf32> to vector<128x4xf32>
    %11 = tpu.transpose %10, [1, 0] : vector<128x4xf32> -> vector<4x128xf32>
    %12 = vector.extract_strided_slice %9 {offsets = [0, 0], sizes = [64, 1], strides = [1, 1]} : vector<64x4xf32> to vector<64x1xf32>
    %13 = vector.extract_strided_slice %11 {offsets = [0, 0], sizes = [1, 128], strides = [1, 1]} : vector<4x128xf32> to vector<1x128xf32>
    %14 = vector.broadcast %12 : vector<64x1xf32> to vector<64x128xf32>
    %15 = vector.broadcast %13 : vector<1x128xf32> to vector<64x128xf32>
    %16 = arith.addf %14, %15 : vector<64x128xf32>
    %cst_12 = arith.constant 0.000000e+00 : f32
    %17 = vector.broadcast %cst_12 : f32 to vector<64x128xf32>
    %18 = arith.cmpf ogt, %16, %17 : vector<64x128xf32>
    %cst_13 = arith.constant 2.000000e-01 : f32
    %19 = vector.broadcast %cst_13 : f32 to vector<64x128xf32>
    %20 = arith.mulf %19, %16 : vector<64x128xf32>
    %21 = arith.select %18, %16, %20 : vector<64x128xi1>, vector<64x128xf32>
    %cst_14 = arith.constant 0.000000e+00 : f32
    %22 = vector.broadcast %cst_14 : f32 to vector<64x128xf32>
    %23 = arith.cmpf ogt, %2, %22 : vector<64x128xf32>
    %cst_15 = arith.constant 9.000000e-15 : f32
    %24 = vector.broadcast %cst_15 : f32 to vector<64x128xf32>
    %25 = arith.select %23, %21, %24 : vector<64x128xi1>, vector<64x128xf32>
    %cst_16 = arith.constant dense<0xFF800000> : vector<64xf32>
    %26 = vector.multi_reduction <maximumf>, %25, %cst_16 [1] : vector<64x128xf32> to vector<64xf32>
    %27 = vector.shape_cast %26 : vector<64xf32> to vector<64x1xf32>
    %28 = vector.broadcast %27 : vector<64x1xf32> to vector<64x128xf32>
    %29 = arith.subf %25, %28 : vector<64x128xf32>
    %30 = math.exp %29 : vector<64x128xf32>
    %cst_17 = arith.constant dense<0.000000e+00> : vector<64xf32>
    %31 = vector.multi_reduction <add>, %30, %cst_17 [1] : vector<64x128xf32> to vector<64xf32>
    %32 = vector.shape_cast %31 : vector<64xf32> to vector<64x1xf32>
    %33 = tpu.reciprocal %32 {approx = true} : vector<64x1xf32> -> vector<64x1xf32>
    %34 = arith.mulf %32, %33 : vector<64x1xf32>
    %cst_18 = arith.constant 2.000000e+00 : f32
    %35 = vector.broadcast %cst_18 : f32 to vector<64x1xf32>
    %36 = arith.subf %35, %34 : vector<64x1xf32>
    %37 = arith.mulf %33, %36 : vector<64x1xf32>
    %38 = vector.broadcast %37 : vector<64x1xf32> to vector<64x128xf32>
    %39 = arith.mulf %30, %38 : vector<64x128xf32>
    %40 = vector.extract_strided_slice %6 {offsets = [0, 0], sizes = [128, 32], strides = [1, 1]} : vector<128x128xf32> to vector<128x32xf32>
    %cst_19 = arith.constant dense<0.000000e+00> : vector<64x32xf32>
    %41 = tpu.matmul %39, %40, %cst_19 {dimension_numbers = #tpu.dot_dimension_numbers<[1], [0], [0], [1], [0, 0, 1, 1], [], []>} : vector<64x128xf32>, vector<128x32xf32>, vector<64x32xf32> -> vector<64x32xf32>
    %cst_20 = arith.constant 0.000000e+00 : f32
    %42 = vector.broadcast %cst_20 : f32 to vector<64x32xf32>
    %43 = arith.cmpf ogt, %41, %42 : vector<64x32xf32>
    %cst_21 = arith.constant 0.000000e+00 : f32
    %44 = vector.broadcast %cst_21 : f32 to vector<64x32xf32>
    %45 = arith.minimumf %41, %44 : vector<64x32xf32>
    %46 = math.exp %45 : vector<64x32xf32>
    %cst_22 = arith.constant 1.000000e+00 : f32
    %47 = vector.broadcast %cst_22 : f32 to vector<64x32xf32>
    %48 = arith.subf %46, %47 : vector<64x32xf32>
    %49 = arith.select %43, %41, %48 : vector<64x32xi1>, vector<64x32xf32>
    %50 = vector.extract_strided_slice %9 {offsets = [0, 1], sizes = [64, 1], strides = [1, 1]} : vector<64x4xf32> to vector<64x1xf32>
    %51 = vector.extract_strided_slice %11 {offsets = [1, 0], sizes = [1, 128], strides = [1, 1]} : vector<4x128xf32> to vector<1x128xf32>
    %52 = vector.broadcast %50 : vector<64x1xf32> to vector<64x128xf32>
    %53 = vector.broadcast %51 : vector<1x128xf32> to vector<64x128xf32>
    %54 = arith.addf %52, %53 : vector<64x128xf32>
    %cst_23 = arith.constant 0.000000e+00 : f32
    %55 = vector.broadcast %cst_23 : f32 to vector<64x128xf32>
    %56 = arith.cmpf ogt, %54, %55 : vector<64x128xf32>
    %cst_24 = arith.constant 2.000000e-01 : f32
    %57 = vector.broadcast %cst_24 : f32 to vector<64x128xf32>
    %58 = arith.mulf %57, %54 : vector<64x128xf32>
    %59 = arith.select %56, %54, %58 : vector<64x128xi1>, vector<64x128xf32>
    %cst_25 = arith.constant 0.000000e+00 : f32
    %60 = vector.broadcast %cst_25 : f32 to vector<64x128xf32>
    %61 = arith.cmpf ogt, %2, %60 : vector<64x128xf32>
    %cst_26 = arith.constant 9.000000e-15 : f32
    %62 = vector.broadcast %cst_26 : f32 to vector<64x128xf32>
    %63 = arith.select %61, %59, %62 : vector<64x128xi1>, vector<64x128xf32>
    %cst_27 = arith.constant dense<0xFF800000> : vector<64xf32>
    %64 = vector.multi_reduction <maximumf>, %63, %cst_27 [1] : vector<64x128xf32> to vector<64xf32>
    %65 = vector.shape_cast %64 : vector<64xf32> to vector<64x1xf32>
    %66 = vector.broadcast %65 : vector<64x1xf32> to vector<64x128xf32>
    %67 = arith.subf %63, %66 : vector<64x128xf32>
    %68 = math.exp %67 : vector<64x128xf32>
    %cst_28 = arith.constant dense<0.000000e+00> : vector<64xf32>
    %69 = vector.multi_reduction <add>, %68, %cst_28 [1] : vector<64x128xf32> to vector<64xf32>
    %70 = vector.shape_cast %69 : vector<64xf32> to vector<64x1xf32>
    %71 = tpu.reciprocal %70 {approx = true} : vector<64x1xf32> -> vector<64x1xf32>
    %72 = arith.mulf %70, %71 : vector<64x1xf32>
    %cst_29 = arith.constant 2.000000e+00 : f32
    %73 = vector.broadcast %cst_29 : f32 to vector<64x1xf32>
    %74 = arith.subf %73, %72 : vector<64x1xf32>
    %75 = arith.mulf %71, %74 : vector<64x1xf32>
    %76 = vector.broadcast %75 : vector<64x1xf32> to vector<64x128xf32>
    %77 = arith.mulf %68, %76 : vector<64x128xf32>
    %78 = vector.extract_strided_slice %6 {offsets = [0, 32], sizes = [128, 32], strides = [1, 1]} : vector<128x128xf32> to vector<128x32xf32>
    %cst_30 = arith.constant dense<0.000000e+00> : vector<64x32xf32>
    %79 = tpu.matmul %77, %78, %cst_30 {dimension_numbers = #tpu.dot_dimension_numbers<[1], [0], [0], [1], [0, 0, 1, 1], [], []>} : vector<64x128xf32>, vector<128x32xf32>, vector<64x32xf32> -> vector<64x32xf32>
    %cst_31 = arith.constant 0.000000e+00 : f32
    %80 = vector.broadcast %cst_31 : f32 to vector<64x32xf32>
    %81 = arith.cmpf ogt, %79, %80 : vector<64x32xf32>
    %cst_32 = arith.constant 0.000000e+00 : f32
    %82 = vector.broadcast %cst_32 : f32 to vector<64x32xf32>
    %83 = arith.minimumf %79, %82 : vector<64x32xf32>
    %84 = math.exp %83 : vector<64x32xf32>
    %cst_33 = arith.constant 1.000000e+00 : f32
    %85 = vector.broadcast %cst_33 : f32 to vector<64x32xf32>
    %86 = arith.subf %84, %85 : vector<64x32xf32>
    %87 = arith.select %81, %79, %86 : vector<64x32xi1>, vector<64x32xf32>
    %88 = vector.extract_strided_slice %9 {offsets = [0, 2], sizes = [64, 1], strides = [1, 1]} : vector<64x4xf32> to vector<64x1xf32>
    %89 = vector.extract_strided_slice %11 {offsets = [2, 0], sizes = [1, 128], strides = [1, 1]} : vector<4x128xf32> to vector<1x128xf32>
    %90 = vector.broadcast %88 : vector<64x1xf32> to vector<64x128xf32>
    %91 = vector.broadcast %89 : vector<1x128xf32> to vector<64x128xf32>
    %92 = arith.addf %90, %91 : vector<64x128xf32>
    %cst_34 = arith.constant 0.000000e+00 : f32
    %93 = vector.broadcast %cst_34 : f32 to vector<64x128xf32>
    %94 = arith.cmpf ogt, %92, %93 : vector<64x128xf32>
    %cst_35 = arith.constant 2.000000e-01 : f32
    %95 = vector.broadcast %cst_35 : f32 to vector<64x128xf32>
    %96 = arith.mulf %95, %92 : vector<64x128xf32>
    %97 = arith.select %94, %92, %96 : vector<64x128xi1>, vector<64x128xf32>
    %cst_36 = arith.constant 0.000000e+00 : f32
    %98 = vector.broadcast %cst_36 : f32 to vector<64x128xf32>
    %99 = arith.cmpf ogt, %2, %98 : vector<64x128xf32>
    %cst_37 = arith.constant 9.000000e-15 : f32
    %100 = vector.broadcast %cst_37 : f32 to vector<64x128xf32>
    %101 = arith.select %99, %97, %100 : vector<64x128xi1>, vector<64x128xf32>
    %cst_38 = arith.constant dense<0xFF800000> : vector<64xf32>
    %102 = vector.multi_reduction <maximumf>, %101, %cst_38 [1] : vector<64x128xf32> to vector<64xf32>
    %103 = vector.shape_cast %102 : vector<64xf32> to vector<64x1xf32>
    %104 = vector.broadcast %103 : vector<64x1xf32> to vector<64x128xf32>
    %105 = arith.subf %101, %104 : vector<64x128xf32>
    %106 = math.exp %105 : vector<64x128xf32>
    %cst_39 = arith.constant dense<0.000000e+00> : vector<64xf32>
    %107 = vector.multi_reduction <add>, %106, %cst_39 [1] : vector<64x128xf32> to vector<64xf32>
    %108 = vector.shape_cast %107 : vector<64xf32> to vector<64x1xf32>
    %109 = tpu.reciprocal %108 {approx = true} : vector<64x1xf32> -> vector<64x1xf32>
    %110 = arith.mulf %108, %109 : vector<64x1xf32>
    %cst_40 = arith.constant 2.000000e+00 : f32
    %111 = vector.broadcast %cst_40 : f32 to vector<64x1xf32>
    %112 = arith.subf %111, %110 : vector<64x1xf32>
    %113 = arith.mulf %109, %112 : vector<64x1xf32>
    %114 = vector.broadcast %113 : vector<64x1xf32> to vector<64x128xf32>
    %115 = arith.mulf %106, %114 : vector<64x128xf32>
    %116 = vector.extract_strided_slice %6 {offsets = [0, 64], sizes = [128, 32], strides = [1, 1]} : vector<128x128xf32> to vector<128x32xf32>
    %cst_41 = arith.constant dense<0.000000e+00> : vector<64x32xf32>
    %117 = tpu.matmul %115, %116, %cst_41 {dimension_numbers = #tpu.dot_dimension_numbers<[1], [0], [0], [1], [0, 0, 1, 1], [], []>} : vector<64x128xf32>, vector<128x32xf32>, vector<64x32xf32> -> vector<64x32xf32>
    %cst_42 = arith.constant 0.000000e+00 : f32
    %118 = vector.broadcast %cst_42 : f32 to vector<64x32xf32>
    %119 = arith.cmpf ogt, %117, %118 : vector<64x32xf32>
    %cst_43 = arith.constant 0.000000e+00 : f32
    %120 = vector.broadcast %cst_43 : f32 to vector<64x32xf32>
    %121 = arith.minimumf %117, %120 : vector<64x32xf32>
    %122 = math.exp %121 : vector<64x32xf32>
    %cst_44 = arith.constant 1.000000e+00 : f32
    %123 = vector.broadcast %cst_44 : f32 to vector<64x32xf32>
    %124 = arith.subf %122, %123 : vector<64x32xf32>
    %125 = arith.select %119, %117, %124 : vector<64x32xi1>, vector<64x32xf32>
    %126 = vector.extract_strided_slice %9 {offsets = [0, 3], sizes = [64, 1], strides = [1, 1]} : vector<64x4xf32> to vector<64x1xf32>
    %127 = vector.extract_strided_slice %11 {offsets = [3, 0], sizes = [1, 128], strides = [1, 1]} : vector<4x128xf32> to vector<1x128xf32>
    %128 = vector.broadcast %126 : vector<64x1xf32> to vector<64x128xf32>
    %129 = vector.broadcast %127 : vector<1x128xf32> to vector<64x128xf32>
    %130 = arith.addf %128, %129 : vector<64x128xf32>
    %cst_45 = arith.constant 0.000000e+00 : f32
    %131 = vector.broadcast %cst_45 : f32 to vector<64x128xf32>
    %132 = arith.cmpf ogt, %130, %131 : vector<64x128xf32>
    %cst_46 = arith.constant 2.000000e-01 : f32
    %133 = vector.broadcast %cst_46 : f32 to vector<64x128xf32>
    %134 = arith.mulf %133, %130 : vector<64x128xf32>
    %135 = arith.select %132, %130, %134 : vector<64x128xi1>, vector<64x128xf32>
    %cst_47 = arith.constant 0.000000e+00 : f32
    %136 = vector.broadcast %cst_47 : f32 to vector<64x128xf32>
    %137 = arith.cmpf ogt, %2, %136 : vector<64x128xf32>
    %cst_48 = arith.constant 9.000000e-15 : f32
    %138 = vector.broadcast %cst_48 : f32 to vector<64x128xf32>
    %139 = arith.select %137, %135, %138 : vector<64x128xi1>, vector<64x128xf32>
    %cst_49 = arith.constant dense<0xFF800000> : vector<64xf32>
    %140 = vector.multi_reduction <maximumf>, %139, %cst_49 [1] : vector<64x128xf32> to vector<64xf32>
    %141 = vector.shape_cast %140 : vector<64xf32> to vector<64x1xf32>
    %142 = vector.broadcast %141 : vector<64x1xf32> to vector<64x128xf32>
    %143 = arith.subf %139, %142 : vector<64x128xf32>
    %144 = math.exp %143 : vector<64x128xf32>
    %cst_50 = arith.constant dense<0.000000e+00> : vector<64xf32>
    %145 = vector.multi_reduction <add>, %144, %cst_50 [1] : vector<64x128xf32> to vector<64xf32>
    %146 = vector.shape_cast %145 : vector<64xf32> to vector<64x1xf32>
    %147 = tpu.reciprocal %146 {approx = true} : vector<64x1xf32> -> vector<64x1xf32>
    %148 = arith.mulf %146, %147 : vector<64x1xf32>
    %cst_51 = arith.constant 2.000000e+00 : f32
    %149 = vector.broadcast %cst_51 : f32 to vector<64x1xf32>
    %150 = arith.subf %149, %148 : vector<64x1xf32>
    %151 = arith.mulf %147, %150 : vector<64x1xf32>
    %152 = vector.broadcast %151 : vector<64x1xf32> to vector<64x128xf32>
    %153 = arith.mulf %144, %152 : vector<64x128xf32>
    %154 = vector.extract_strided_slice %6 {offsets = [0, 96], sizes = [128, 32], strides = [1, 1]} : vector<128x128xf32> to vector<128x32xf32>
    %cst_52 = arith.constant dense<0.000000e+00> : vector<64x32xf32>
    %155 = tpu.matmul %153, %154, %cst_52 {dimension_numbers = #tpu.dot_dimension_numbers<[1], [0], [0], [1], [0, 0, 1, 1], [], []>} : vector<64x128xf32>, vector<128x32xf32>, vector<64x32xf32> -> vector<64x32xf32>
    %cst_53 = arith.constant 0.000000e+00 : f32
    %156 = vector.broadcast %cst_53 : f32 to vector<64x32xf32>
    %157 = arith.cmpf ogt, %155, %156 : vector<64x32xf32>
    %cst_54 = arith.constant 0.000000e+00 : f32
    %158 = vector.broadcast %cst_54 : f32 to vector<64x32xf32>
    %159 = arith.minimumf %155, %158 : vector<64x32xf32>
    %160 = math.exp %159 : vector<64x32xf32>
    %cst_55 = arith.constant 1.000000e+00 : f32
    %161 = vector.broadcast %cst_55 : f32 to vector<64x32xf32>
    %162 = arith.subf %160, %161 : vector<64x32xf32>
    %163 = arith.select %157, %155, %162 : vector<64x32xi1>, vector<64x32xf32>
    %164 = tpu.concatenate %49, %87, %125, %163 in 1 : vector<64x32xf32>, vector<64x32xf32>, vector<64x32xf32>, vector<64x32xf32> -> vector<64x128xf32>
    %c0_56 = arith.constant 0 : index
    %c0_57 = arith.constant 0 : index
    %165 = vector.load %arg6[%c0_56, %c0_57] : memref<64x128xf32, #tpu.memory_space<vmem>>, vector<64x128xf32>
    tpu.vector_store %arg6[%c0_56, %c0_57], %164 {strides = array<i32>} : memref<64x128xf32, #tpu.memory_space<vmem>>, vector<64x128xf32>,
    return
  }
  func.func @transform_0(%arg0: i32) -> (i32, i32) {
    %c0_i32 = arith.constant 0 : i32
    %c0_i32_0 = arith.constant 0 : i32
    return %arg0, %c0_i32 : i32, i32
  }
  func.func @transform_1(%arg0: i32) -> (i32, i32) {
    %c0_i32 = arith.constant 0 : i32
    %c0_i32_0 = arith.constant 0 : i32
    %c0_i32_1 = arith.constant 0 : i32
    return %c0_i32, %c0_i32_0 : i32, i32
  }
  func.func @transform_2(%arg0: i32) -> (i32, i32) {
    %c0_i32 = arith.constant 0 : i32
    %c0_i32_0 = arith.constant 0 : i32
    return %arg0, %c0_i32 : i32, i32
  }
  func.func @transform_3(%arg0: i32) -> (i32, i32) {
    %c0_i32 = arith.constant 0 : i32
    %c0_i32_0 = arith.constant 0 : i32
    %c0_i32_1 = arith.constant 0 : i32
    return %c0_i32, %c0_i32_0 : i32, i32
  }
  func.func @transform_4(%arg0: i32) -> (i32, i32) {
    %c0_i32 = arith.constant 0 : i32
    %c0_i32_0 = arith.constant 0 : i32
    %c0_i32_1 = arith.constant 0 : i32
    return %c0_i32, %c0_i32_0 : i32, i32
  }
  func.func @transform_5(%arg0: i32) -> (i32, i32) {
    %c0_i32 = arith.constant 0 : i32
    %c0_i32_0 = arith.constant 0 : i32
    return %arg0, %c0_i32 : i32, i32
  }
}

</mosaic_0001>

<llo_original>
// kernel: tpu_custom_call.1
$region0: #{tpu_custom_call.1}
  #allocation0 [shape = 'u32[]', space=smem, size = 0x4, offset = 0x4, fixed_abs, tag = 'smem constant byte address 0x4 - core index']
  #allocation1 [shape = 'u32[144,128]{1,0:T(1,128)}', space=vmem, size = 0x12000, scoped, tag = 'internal scratch']
  %s0 = inlined_call_operand.vmem [shape: f32[128,16], index: 0, kind: input, shape index: {}]
  %s1 = inlined_call_operand.vmem [shape: f32[128,16], index: 1, kind: input, shape index: {}]
  %s2 = inlined_call_operand.vmem [shape: f32[128,128], index: 2, kind: input, shape index: {}]
  %s3 = inlined_call_operand.vmem [shape: f32[16,128], index: 3, kind: input, shape index: {}]
  %s4 = inlined_call_operand.vmem [shape: f32[128,8], index: 4, kind: input, shape index: {}]
  %s5 = inlined_call_operand.hbm [shape: f32[128,128], index: 5, kind: output, shape index: {}]
  %s6 = sld [smem:[#allocation0]]
  $region53: #{tpu_custom_call.1} parent=0
    _
  %s8 = ssub.s32 1, %s6
  %s9 = scalar_select 0, %s8, %s6
  $region1: #{tpu_custom_call.1} parent=0
    #allocation2 [shape = 'u8[65536]{0}', space=vmem, size = 0x10000, scoped, tag = 'output window, operand 0']
    #allocation3 [shape = 's32[2]{0}', space=sflag, size = 0x8, scoped, tag = 'scoped memory for tpu_custom_call.1']
    %10 = vsyncpa [#allocation3], 0
    %s11 = scalar_lea.sflag [#allocation3], 1
    %12 = vsyncpa %s11, 0
    loop: start=0, step=1, limit=4
    $region2: #{tpu_custom_call.1} parent=1 // loop_pre_header
      _
    $region3: #{tpu_custom_call.1} parent=1 // loop_header
      %s14 = sphi 0, %s18
      %p15 = scmp.ge.s32.totalorder %s14, 4
      %s24 = sphi 0, %s26
      %s27 = sphi 0, %s24
      %s28 = sphi 0, %s27
      %s44 = sphi 0, %s28
      %s48 = sphi 0, %s48
      %s50 = sphi 0, %s48
      %s51 = sphi 0, %s50
      %s65 = sphi 0, %s51
      %s71 = sphi 0, %s73
      %s74 = sphi 0, %s71
      %s75 = sphi 0, %s74
      %s91 = sphi 0, %s75
      %s95 = sphi 0, %s95
      %s97 = sphi 0, %s95
      %s98 = sphi 0, %s97
      %s112 = sphi 0, %s98
      %s116 = sphi 0, %s116
      %s118 = sphi 0, %s116
      %s119 = sphi 0, %s118
      %s133 = sphi 0, %s119
      %s139 = sphi 0, %s141
      %s142 = sphi 0, %s139
      %s143 = sphi 0, %s142
      %s159 = sphi 0, %s143
    $region4: #{tpu_custom_call.1} parent=1 // loop_header_branch
      %17 = sbr.rel (%p15) target = $region8
    $region5: #{tpu_custom_call.1} parent=1 // loop_body
      %s19 = ssub.s32 %s14, 1
      %s20 = ssub.s32 %s14, 2
      %s21 = sadd.s32 %s14, 1
      %s22 = ssub.s32 %s14, %s21
      %p23 = scmp.eq.s32.totalorder %s22, 0
      %s25 = sadd.s32 %s24, 1
      %s26 = scalar_select %p23, %s24, %s25
      %p29 = pneg %p23
      %p30 = scmp.eq.s32.totalorder %s14, 1
      %p31 = por %p29, %p30
      %p32 = scmp.ne.s32.totalorder %s24, %s27
      %p33 = scmp.eq.s32.totalorder %s14, 0
      %p34 = por %p32, %p33
      %p35 = scmp.ne.s32.totalorder %s24, %s27
      %p36 = scmp.eq.s32.totalorder %s19, 1
      %p37 = por %p35, %p36
      %p38 = scmp.ne.s32.totalorder %s27, %s28
      %p39 = scmp.eq.s32.totalorder %s19, 0
      %p40 = por %p38, %p39
      %p41 = scmp.ne.s32.totalorder %s27, %s28
      %p42 = scmp.eq.s32.totalorder %s20, 1
      %p43 = por %p41, %p42
      %p45 = scmp.ne.s32.totalorder %s28, %s44
      %p46 = scmp.eq.s32.totalorder %s20, 0
      %p47 = por %p45, %p46
      %s49 = sadd.s32 %s48, 1
      %p52 = scmp.eq.s32.totalorder %s14, 1
      %p53 = scmp.ne.s32.totalorder %s48, %s50
      %p54 = scmp.eq.s32.totalorder %s14, 0
      %p55 = por %p53, %p54
      %p56 = scmp.ne.s32.totalorder %s48, %s50
      %p57 = scmp.eq.s32.totalorder %s19, 1
      %p58 = por %p56, %p57
      %p59 = scmp.ne.s32.totalorder %s50, %s51
      %p60 = scmp.eq.s32.totalorder %s19, 0
      %p61 = por %p59, %p60
      %p62 = scmp.ne.s32.totalorder %s50, %s51
      %p63 = scmp.eq.s32.totalorder %s20, 1
      %p64 = por %p62, %p63
      %p66 = scmp.ne.s32.totalorder %s51, %s65
      %p67 = scmp.eq.s32.totalorder %s20, 0
      %p68 = por %p66, %p67
      %s69 = ssub.s32 %s14, %s21
      %p70 = scmp.eq.s32.totalorder %s69, 0
      %s72 = sadd.s32 %s71, 1
      %s73 = scalar_select %p70, %s71, %s72
      %p76 = pneg %p70
      %p77 = scmp.eq.s32.totalorder %s14, 1
      %p78 = por %p76, %p77
      %p79 = scmp.ne.s32.totalorder %s71, %s74
      %p80 = scmp.eq.s32.totalorder %s14, 0
      %p81 = por %p79, %p80
      %p82 = scmp.ne.s32.totalorder %s71, %s74
      %p83 = scmp.eq.s32.totalorder %s19, 1
      %p84 = por %p82, %p83
      %p85 = scmp.ne.s32.totalorder %s74, %s75
      %p86 = scmp.eq.s32.totalorder %s19, 0
      %p87 = por %p85, %p86
      %p88 = scmp.ne.s32.totalorder %s74, %s75
      %p89 = scmp.eq.s32.totalorder %s20, 1
      %p90 = por %p88, %p89
      %p92 = scmp.ne.s32.totalorder %s75, %s91
      %p93 = scmp.eq.s32.totalorder %s20, 0
      %p94 = por %p92, %p93
      %s96 = sadd.s32 %s95, 1
      %p99 = scmp.eq.s32.totalorder %s14, 1
      %p100 = scmp.ne.s32.totalorder %s95, %s97
      %p101 = scmp.eq.s32.totalorder %s14, 0
      %p102 = por %p100, %p101
      %p103 = scmp.ne.s32.totalorder %s95, %s97
      %p104 = scmp.eq.s32.totalorder %s19, 1
      %p105 = por %p103, %p104
      %p106 = scmp.ne.s32.totalorder %s97, %s98
      %p107 = scmp.eq.s32.totalorder %s19, 0
      %p108 = por %p106, %p107
      %p109 = scmp.ne.s32.totalorder %s97, %s98
      %p110 = scmp.eq.s32.totalorder %s20, 1
      %p111 = por %p109, %p110
      %p113 = scmp.ne.s32.totalorder %s98, %s112
      %p114 = scmp.eq.s32.totalorder %s20, 0
      %p115 = por %p113, %p114
      %s117 = sadd.s32 %s116, 1
      %p120 = scmp.eq.s32.totalorder %s14, 1
      %p121 = scmp.ne.s32.totalorder %s116, %s118
      %p122 = scmp.eq.s32.totalorder %s14, 0
      %p123 = por %p121, %p122
      %p124 = scmp.ne.s32.totalorder %s116, %s118
      %p125 = scmp.eq.s32.totalorder %s19, 1
      %p126 = por %p124, %p125
      %p127 = scmp.ne.s32.totalorder %s118, %s119
      %p128 = scmp.eq.s32.totalorder %s19, 0
      %p129 = por %p127, %p128
      %p130 = scmp.ne.s32.totalorder %s118, %s119
      %p131 = scmp.eq.s32.totalorder %s20, 1
      %p132 = por %p130, %p131
      %p134 = scmp.ne.s32.totalorder %s119, %s133
      %p135 = scmp.eq.s32.totalorder %s20, 0
      %p136 = por %p134, %p135
      %s137 = ssub.s32 %s14, %s21
      %p138 = scmp.eq.s32.totalorder %s137, 0
      %s140 = sadd.s32 %s139, 1
      %s141 = scalar_select %p138, %s139, %s140
      %p144 = pneg %p138
      %p145 = scmp.eq.s32.totalorder %s14, 1
      %p146 = por %p144, %p145
      %p147 = scmp.ne.s32.totalorder %s139, %s142
      %p148 = scmp.eq.s32.totalorder %s14, 0
      %p149 = por %p147, %p148
      %p150 = scmp.ne.s32.totalorder %s139, %s142
      %p151 = scmp.eq.s32.totalorder %s19, 1
      %p152 = por %p150, %p151
      %p153 = scmp.ne.s32.totalorder %s142, %s143
      %p154 = scmp.eq.s32.totalorder %s19, 0
      %p155 = por %p153, %p154
      %p156 = scmp.ne.s32.totalorder %s142, %s143
      %p157 = scmp.eq.s32.totalorder %s20, 1
      %p158 = por %p156, %p157
      %p160 = scmp.ne.s32.totalorder %s143, %s159
      %p161 = scmp.eq.s32.totalorder %s20, 0
      %p162 = por %p160, %p161
      %p163 = scmp.le.s32.totalorder 1, %s14
      %p164 = scmp.lt.s32.totalorder %s14, 3
      %p165 = pnand %p163, %p164
      %p166 = pneg %p165
      // Predicated region
      $region9: #{tpu_custom_call.1} parent=5 // pred_check
        _
      $region10: #{tpu_custom_call.1} parent=5 // pred_check_branch
        %168 = sbr.rel (%p165) target = $region12
      $region11: #{tpu_custom_call.1} parent=5 // pred_region
        %s169 = ssub.s32 %s14, 1
        // Predicated region
        $region13: #{tpu_custom_call.1} parent=11 // pred_check
          %p170 = pneg %p61
        $region14: #{tpu_custom_call.1} parent=11 // pred_check_branch
          %172 = sbr.rel (%p170) target = $region16
        $region15: #{tpu_custom_call.1} parent=11 // pred_region
          _
        $region16: #{tpu_custom_call.1} parent=11 // pred_fallthru
          _
        // Predicated region
        $region17: #{tpu_custom_call.1} parent=11 // pred_check
          %p173 = pneg %p108
        $region18: #{tpu_custom_call.1} parent=11 // pred_check_branch
          %175 = sbr.rel (%p173) target = $region20
        $region19: #{tpu_custom_call.1} parent=11 // pred_region
          _
        $region20: #{tpu_custom_call.1} parent=11 // pred_fallthru
          _
        // Predicated region
        $region21: #{tpu_custom_call.1} parent=11 // pred_check
          %p176 = pneg %p129
        $region22: #{tpu_custom_call.1} parent=11 // pred_check_branch
          %178 = sbr.rel (%p176) target = $region24
        $region23: #{tpu_custom_call.1} parent=11 // pred_region
          _
        $region24: #{tpu_custom_call.1} parent=11 // pred_fallthru
          _
      $region12: #{tpu_custom_call.1} parent=5 // pred_fallthru
        _
      %p179 = scmp.lt.s32.totalorder %s14, 2
      // Predicated region
      $region25: #{tpu_custom_call.1} parent=5 // pred_check
        %p180 = pneg %p179
      $region26: #{tpu_custom_call.1} parent=5 // pred_check_branch
        %182 = sbr.rel (%p180) target = $region28
      $region27: #{tpu_custom_call.1} parent=5 // pred_region
        // Predicated region
        $region29: #{tpu_custom_call.1} parent=27 // pred_check
          %p183 = pneg %p34
        $region30: #{tpu_custom_call.1} parent=27 // pred_check_branch
          %185 = sbr.rel (%p183) target = $region32
        $region31: #{tpu_custom_call.1} parent=27 // pred_region
          %s186 = smul.u32 8, %s14
          %p187 = scmp.lt.s32.totalorder %s186, 15
          %s188 = scalar_select %p187, %s186, 15
          %s189 = smul.addr %s188, 8
          %s190 = scalar_lea.vmem %s0, %s189
          %s191 = smul.u32 8, %s14
        $region32: #{tpu_custom_call.1} parent=27 // pred_fallthru
          _
        // Predicated region
        $region33: #{tpu_custom_call.1} parent=27 // pred_check
          %p192 = pneg %p81
        $region34: #{tpu_custom_call.1} parent=27 // pred_check_branch
          %194 = sbr.rel (%p192) target = $region36
        $region35: #{tpu_custom_call.1} parent=27 // pred_region
          %s195 = smul.u32 8, %s14
          %p196 = scmp.lt.s32.totalorder %s195, 15
          %s197 = scalar_select %p196, %s195, 15
          %s198 = smul.addr %s197, 8
          %s199 = scalar_lea.vmem %s2, %s198
          %s200 = smul.u32 8, %s14
        $region36: #{tpu_custom_call.1} parent=27 // pred_fallthru
          _
      $region28: #{tpu_custom_call.1} parent=5 // pred_fallthru
        _
      %p201 = scmp.le.s32.totalorder 1, %s14
      %p202 = scmp.lt.s32.totalorder %s14, 3
      %p203 = pnand %p201, %p202
      %p204 = pneg %p203
      // Predicated region
      $region37: #{tpu_custom_call.1} parent=5 // pred_check
        _
      $region38: #{tpu_custom_call.1} parent=5 // pred_check_branch
        %206 = sbr.rel (%p203) target = $region40
      $region39: #{tpu_custom_call.1} parent=5 // pred_region
        %s207 = ssub.s32 %s14, 1
        %s208 = smul.u32 8, %s19
        %p209 = scmp.lt.s32.totalorder %s208, 15
        %s210 = scalar_select %p209, %s208, 15
        %s211 = smul.addr %s210, 8
        %s212 = scalar_lea.vmem %s0, %s211
        %p213 = pneg %p40
        %p214 = pneg %p37
        %p215 = pneg %p61
        %p216 = pneg %p58
        %s217 = smul.u32 8, %s19
        %p218 = scmp.lt.s32.totalorder %s217, 15
        %s219 = scalar_select %p218, %s217, 15
        %s220 = smul.addr %s219, 8
        %s221 = scalar_lea.vmem %s2, %s220
        %p222 = pneg %p87
        %p223 = pneg %p84
        %p224 = pneg %p108
        %p225 = pneg %p105
        %p226 = pneg %p129
        %p227 = pneg %p126
        %p228 = pneg %p155
        %p229 = pneg %p152
        %s230 = sand.u32 %s142, 1
        %s231 = scalar_lea.sflag [#allocation3], %s230
        %s232 = sand.u32 %s142, 1
        %s233 = smul.addr %s232, 64
        %s234 = scalar_lea.vmem [#allocation2], %s233
        %s235 = smul.u32 8, %s19
        %p236 = scmp.lt.s32.totalorder %s235, 15
        %s237 = scalar_select %p236, %s235, 15
        %s238 = smul.addr %s237, 8
        %s239 = scalar_lea.vmem %s0, %s238
        %s240 = smul.u32 8, %s19
        %s241 = smul.u32 8, %s19
        %p242 = scmp.lt.s32.totalorder %s241, 15
        %s243 = scalar_select %p242, %s241, 15
        %s244 = smul.addr %s243, 8
        %s245 = scalar_lea.vmem %s2, %s244
        %s246 = smul.u32 8, %s19
        %s247 = smul.u32 8, %s19
        %v248 = vld [vmem:[%s239] sm:$0xff]
        %v249 = vld [vmem:[%s239 + $0x8] sm:$0xff]
        %v250 = vld [vmem:[%s239 + $0x10] sm:$0xff]
        %v251 = vld [vmem:[%s239 + $0x18] sm:$0xff]
        %v252 = vld [vmem:[%s239 + $0x20] sm:$0xff]
        %v253 = vld [vmem:[%s239 + $0x28] sm:$0xff]
        %v254 = vld [vmem:[%s239 + $0x30] sm:$0xff]
        %v255 = vld [vmem:[%s239 + $0x38] sm:$0xff]
        %v256 = vld [vmem:[%s1] sm:$0xff]
        %v257 = vld [vmem:[%s1 + $0x8] sm:$0xff]
        %v258 = vld [vmem:[%s1 + $0x10] sm:$0xff]
        %v259 = vld [vmem:[%s1 + $0x18] sm:$0xff]
        %v260 = vld [vmem:[%s1 + $0x20] sm:$0xff]
        %v261 = vld [vmem:[%s1 + $0x28] sm:$0xff]
        %v262 = vld [vmem:[%s1 + $0x30] sm:$0xff]
        %v263 = vld [vmem:[%s1 + $0x38] sm:$0xff]
        %v264 = vld [vmem:[%s1 + $0x40] sm:$0xff]
        %v265 = vld [vmem:[%s1 + $0x48] sm:$0xff]
        %v266 = vld [vmem:[%s1 + $0x50] sm:$0xff]
        %v267 = vld [vmem:[%s1 + $0x58] sm:$0xff]
        %v268 = vld [vmem:[%s1 + $0x60] sm:$0xff]
        %v269 = vld [vmem:[%s1 + $0x68] sm:$0xff]
        %v270 = vld [vmem:[%s1 + $0x70] sm:$0xff]
        %v271 = vld [vmem:[%s1 + $0x78] sm:$0xff]
        %v272 = vld [vmem:[%s245] sm:$0xff]
        %v273 = vld [vmem:[%s245 + $0x8] sm:$0xff]
        %v274 = vld [vmem:[%s245 + $0x10] sm:$0xff]
        %v275 = vld [vmem:[%s245 + $0x18] sm:$0xff]
        %v276 = vld [vmem:[%s245 + $0x20] sm:$0xff]
        %v277 = vld [vmem:[%s245 + $0x28] sm:$0xff]
        %v278 = vld [vmem:[%s245 + $0x30] sm:$0xff]
        %v279 = vld [vmem:[%s245 + $0x38] sm:$0xff]
        %v280 = vld [vmem:[%s3] sm:$0xff]
        %v281 = vld [vmem:[%s3 + $0x8] sm:$0xff]
        %v282 = vld [vmem:[%s4] sm:$0xff]
        %v283 = vld [vmem:[%s4 + $0x8] sm:$0xff]
        %v284 = vld [vmem:[%s4 + $0x10] sm:$0xff]
        %v285 = vld [vmem:[%s4 + $0x18] sm:$0xff]
        %v286 = vld [vmem:[%s4 + $0x20] sm:$0xff]
        %v287 = vld [vmem:[%s4 + $0x28] sm:$0xff]
        %v288 = vld [vmem:[%s4 + $0x30] sm:$0xff]
        %v289 = vld [vmem:[%s4 + $0x38] sm:$0xff]
        %v290 = vld [vmem:[%s4 + $0x40] sm:$0xff]
        %v291 = vld [vmem:[%s4 + $0x48] sm:$0xff]
        %v292 = vld [vmem:[%s4 + $0x50] sm:$0xff]
        %v293 = vld [vmem:[%s4 + $0x58] sm:$0xff]
        %v294 = vld [vmem:[%s4 + $0x60] sm:$0xff]
        %v295 = vld [vmem:[%s4 + $0x68] sm:$0xff]
        %v296 = vld [vmem:[%s4 + $0x70] sm:$0xff]
        %v297 = vld [vmem:[%s4 + $0x78] sm:$0xff]
        %vm298 = vcmask 130048
        %v300 = vsel %vm298, %v248, 0
        %v303 = vsel %vm298, %v249, 0
        %v306 = vsel %vm298, %v250, 0
        %v309 = vsel %vm298, %v251, 0
        %v312 = vsel %vm298, %v252, 0
        %v315 = vsel %vm298, %v253, 0
        %v318 = vsel %vm298, %v254, 0
        %v321 = vsel %vm298, %v255, 0
        %323 = vmatprep.subr.mxu0 0.0
        %324 = vmatpush1.msra.mxu0 %v280
        %325 = vmatprep.subr.mxu0 0.0
        %326 = vmatpush1.msra.mxu0 %v281
        %327 = vmatprep.subr.mxu0 0.0
        %328 = vmatpush1.msra.mxu0 0.0
        %329 = vmatprep.subr.mxu0 0.0
        %330 = vmatpush1.msra.mxu0 0.0
        %331 = vmatprep.subr.mxu0 0.0
        %332 = vmatpush1.msra.mxu0 0.0
        %333 = vmatprep.subr.mxu0 0.0
        %334 = vmatpush1.msra.mxu0 0.0
        %335 = vmatprep.subr.mxu0 0.0
        %336 = vmatpush1.msra.mxu0 0.0
        %337 = vmatprep.subr.mxu0 0.0
        %338 = vmatpush1.msra.mxu0 0.0
        %339 = vmatprep.subr.mxu0 0.0
        %340 = vmatpush1.msra.mxu0 0.0
        %341 = vmatprep.subr.mxu0 0.0
        %342 = vmatpush1.msra.mxu0 0.0
        %343 = vmatprep.subr.mxu0 0.0
        %344 = vmatpush1.msra.mxu0 0.0
        %345 = vmatprep.subr.mxu0 0.0
        %346 = vmatpush1.msra.mxu0 0.0
        %347 = vmatprep.subr.mxu0 0.0
        %348 = vmatpush1.msra.mxu0 0.0
        %349 = vmatprep.subr.mxu0 0.0
        %350 = vmatpush1.msra.mxu0 0.0
        %351 = vmatprep.subr.mxu0 0.0
        %352 = vmatpush1.msra.mxu0 0.0
        %353 = vmatprep.subr.mxu0 0.0
        %354 = vmatpush1.msra.mxu0 0.0
        %355 = vmatprep.subr.mxu0 0.0
        %356 = vmatpush1.msra.mxu0 0.0
        %357 = vmatprep.subr.mxu0 0.0
        %358 = vmatpush1.msra.mxu0 0.0
        %359 = vmatprep.subr.mxu0 0.0
        %360 = vmatpush1.msra.mxu0 0.0
        %361 = vmatprep.subr.mxu0 0.0
        %362 = vmatpush1.msra.mxu0 0.0
        %363 = vmatprep.subr.mxu0 0.0
        %364 = vmatpush1.msra.mxu0 0.0
        %365 = vmatprep.subr.mxu0 0.0
        %366 = vmatpush1.msra.mxu0 0.0
        %367 = vmatprep.subr.mxu0 0.0
        %368 = vmatpush1.msra.mxu0 0.0
        %369 = vmatprep.subr.mxu0 0.0
        %370 = vmatpush1.msra.mxu0 0.0
        %371 = vmatprep.subr.mxu0 0.0
        %372 = vmatpush1.msra.mxu0 0.0
        %373 = vmatprep.subr.mxu0 0.0
        %374 = vmatpush1.msra.mxu0 0.0
        %375 = vmatprep.subr.mxu0 0.0
        %376 = vmatpush1.msra.mxu0 0.0
        %377 = vmatprep.subr.mxu0 0.0
        %378 = vmatpush1.msra.mxu0 0.0
        %379 = vmatprep.subr.mxu0 0.0
        %380 = vmatpush1.msra.mxu0 0.0
        %381 = vmatprep.subr.mxu0 0.0
        %382 = vmatpush1.msra.mxu0 0.0
        %383 = vmatprep.subr.mxu0 0.0
        %384 = vmatpush1.msra.mxu0 0.0
        %385 = vmatprep.subr.mxu0 0.0
        %386 = vmatpush1.msra.mxu0 0.0
        %387 = vmatprep.mubr.f32.mxu0 0.0
        %388 = vmatmul.mubr.f32.gmra.mrb[0].mxu0 %v300
        %v389 = vpop.f32.mrb[0].mxu0
        %v390 = vadd.f32 0.0, %v389
        %v391 = vpop.f32.mrb[0].mxu0
        %392 = vmatprep.mubr.f32.mxu0 0.0
        %393 = vmatmul.mubr.f32.gmra.mrb[0].mxu0 %v303
        %v394 = vpop.f32.mrb[0].mxu0
        %v395 = vadd.f32 0.0, %v394
        %v396 = vpop.f32.mrb[0].mxu0
        %397 = vmatprep.mubr.f32.mxu0 0.0
        %398 = vmatmul.mubr.f32.gmra.mrb[0].mxu0 %v306
        %v399 = vpop.f32.mrb[0].mxu0
        %v400 = vadd.f32 0.0, %v399
        %v401 = vpop.f32.mrb[0].mxu0
        %402 = vmatprep.mubr.f32.mxu0 0.0
        %403 = vmatmul.mubr.f32.gmra.mrb[0].mxu0 %v309
        %v404 = vpop.f32.mrb[0].mxu0
        %v405 = vadd.f32 0.0, %v404
        %v406 = vpop.f32.mrb[0].mxu0
        %407 = vmatprep.mubr.f32.mxu0 0.0
        %408 = vmatmul.mubr.f32.gmra.mrb[0].mxu0 %v312
        %v409 = vpop.f32.mrb[0].mxu0
        %v410 = vadd.f32 0.0, %v409
        %v411 = vpop.f32.mrb[0].mxu0
        %412 = vmatprep.mubr.f32.mxu0 0.0
        %413 = vmatmul.mubr.f32.gmra.mrb[0].mxu0 %v315
        %v414 = vpop.f32.mrb[0].mxu0
        %v415 = vadd.f32 0.0, %v414
        %v416 = vpop.f32.mrb[0].mxu0
        %417 = vmatprep.mubr.f32.mxu0 0.0
        %418 = vmatmul.mubr.f32.gmra.mrb[0].mxu0 %v318
        %v419 = vpop.f32.mrb[0].mxu0
        %v420 = vadd.f32 0.0, %v419
        %v421 = vpop.f32.mrb[0].mxu0
        %422 = vmatprep.mubr.f32.mxu0 0.0
        %423 = vmatmul.mubr.f32.gmra.mrb[0].mxu0 %v321
        %v424 = vpop.f32.mrb[0].mxu0
        %v425 = vadd.f32 0.0, %v424
        %v426 = vpop.f32.mrb[0].mxu0
        %427 = vdwg.mxu0
        %v429 = vsel %vm298, %v256, 0
        %v432 = vsel %vm298, %v257, 0
        %v435 = vsel %vm298, %v258, 0
        %v438 = vsel %vm298, %v259, 0
        %v441 = vsel %vm298, %v260, 0
        %v444 = vsel %vm298, %v261, 0
        %v447 = vsel %vm298, %v262, 0
        %v450 = vsel %vm298, %v263, 0
        %v453 = vsel %vm298, %v264, 0
        %v456 = vsel %vm298, %v265, 0
        %v459 = vsel %vm298, %v266, 0
        %v462 = vsel %vm298, %v267, 0
        %v465 = vsel %vm298, %v268, 0
        %v468 = vsel %vm298, %v269, 0
        %v471 = vsel %vm298, %v270, 0
        %v474 = vsel %vm298, %v271, 0
        %476 = vmatprep.subr.mxu0 0.0
        %477 = vmatpush1.msra.mxu0 %v280
        %478 = vmatprep.subr.mxu0 0.0
        %479 = vmatpush1.msra.mxu0 %v281
        %480 = vmatprep.subr.mxu0 0.0
        %481 = vmatpush1.msra.mxu0 0.0
        %482 = vmatprep.subr.mxu0 0.0
        %483 = vmatpush1.msra.mxu0 0.0
        %484 = vmatprep.subr.mxu0 0.0
        %485 = vmatpush1.msra.mxu0 0.0
        %486 = vmatprep.subr.mxu0 0.0
        %487 = vmatpush1.msra.mxu0 0.0
        %488 = vmatprep.subr.mxu0 0.0
        %489 = vmatpush1.msra.mxu0 0.0
        %490 = vmatprep.subr.mxu0 0.0
        %491 = vmatpush1.msra.mxu0 0.0
        %492 = vmatprep.subr.mxu0 0.0
        %493 = vmatpush1.msra.mxu0 0.0
        %494 = vmatprep.subr.mxu0 0.0
        %495 = vmatpush1.msra.mxu0 0.0
        %496 = vmatprep.subr.mxu0 0.0
        %497 = vmatpush1.msra.mxu0 0.0
        %498 = vmatprep.subr.mxu0 0.0
        %499 = vmatpush1.msra.mxu0 0.0
        %500 = vmatprep.subr.mxu0 0.0
        %501 = vmatpush1.msra.mxu0 0.0
        %502 = vmatprep.subr.mxu0 0.0
        %503 = vmatpush1.msra.mxu0 0.0
        %504 = vmatprep.subr.mxu0 0.0
        %505 = vmatpush1.msra.mxu0 0.0
        %506 = vmatprep.subr.mxu0 0.0
        %507 = vmatpush1.msra.mxu0 0.0
        %508 = vmatprep.subr.mxu0 0.0
        %509 = vmatpush1.msra.mxu0 0.0
        %510 = vmatprep.subr.mxu0 0.0
        %511 = vmatpush1.msra.mxu0 0.0
        %512 = vmatprep.subr.mxu0 0.0
        %513 = vmatpush1.msra.mxu0 0.0
        %514 = vmatprep.subr.mxu0 0.0
        %515 = vmatpush1.msra.mxu0 0.0
        %516 = vmatprep.subr.mxu0 0.0
        %517 = vmatpush1.msra.mxu0 0.0
        %518 = vmatprep.subr.mxu0 0.0
        %519 = vmatpush1.msra.mxu0 0.0
        %520 = vmatprep.subr.mxu0 0.0
        %521 = vmatpush1.msra.mxu0 0.0
        %522 = vmatprep.subr.mxu0 0.0
        %523 = vmatpush1.msra.mxu0 0.0
        %524 = vmatprep.subr.mxu0 0.0
        %525 = vmatpush1.msra.mxu0 0.0
        %526 = vmatprep.subr.mxu0 0.0
        %527 = vmatpush1.msra.mxu0 0.0
        %528 = vmatprep.subr.mxu0 0.0
        %529 = vmatpush1.msra.mxu0 0.0
        %530 = vmatprep.subr.mxu0 0.0
        %531 = vmatpush1.msra.mxu0 0.0
        %532 = vmatprep.subr.mxu0 0.0
        %533 = vmatpush1.msra.mxu0 0.0
        %534 = vmatprep.subr.mxu0 0.0
        %535 = vmatpush1.msra.mxu0 0.0
        %536 = vmatprep.subr.mxu0 0.0
        %537 = vmatpush1.msra.mxu0 0.0
        %538 = vmatprep.subr.mxu0 0.0
        %539 = vmatpush1.msra.mxu0 0.0
        %540 = vmatprep.mubr.f32.mxu0 0.0
        %541 = vmatmul.mubr.f32.gmra.mrb[0].mxu0 %v429
        %v542 = vpop.f32.mrb[0].mxu0
        %v543 = vadd.f32 0.0, %v542
        %v544 = vpop.f32.mrb[0].mxu0
        %545 = vmatprep.mubr.f32.mxu0 0.0
        %546 = vmatmul.mubr.f32.gmra.mrb[0].mxu0 %v432
        %v547 = vpop.f32.mrb[0].mxu0
        %v548 = vadd.f32 0.0, %v547
        %v549 = vpop.f32.mrb[0].mxu0
        %550 = vmatprep.mubr.f32.mxu0 0.0
        %551 = vmatmul.mubr.f32.gmra.mrb[0].mxu0 %v435
        %v552 = vpop.f32.mrb[0].mxu0
        %v553 = vadd.f32 0.0, %v552
        %v554 = vpop.f32.mrb[0].mxu0
        %555 = vmatprep.mubr.f32.mxu0 0.0
        %556 = vmatmul.mubr.f32.gmra.mrb[0].mxu0 %v438
        %v557 = vpop.f32.mrb[0].mxu0
        %v558 = vadd.f32 0.0, %v557
        %v559 = vpop.f32.mrb[0].mxu0
        %560 = vmatprep.mubr.f32.mxu0 0.0
        %561 = vmatmul.mubr.f32.gmra.mrb[0].mxu0 %v441
        %v562 = vpop.f32.mrb[0].mxu0
        %v563 = vadd.f32 0.0, %v562
        %v564 = vpop.f32.mrb[0].mxu0
        %565 = vmatprep.mubr.f32.mxu0 0.0
        %566 = vmatmul.mubr.f32.gmra.mrb[0].mxu0 %v444
        %v567 = vpop.f32.mrb[0].mxu0
        %v568 = vadd.f32 0.0, %v567
        %v569 = vpop.f32.mrb[0].mxu0
        %570 = vmatprep.mubr.f32.mxu0 0.0
        %571 = vmatmul.mubr.f32.gmra.mrb[0].mxu0 %v447
        %v572 = vpop.f32.mrb[0].mxu0
        %v573 = vadd.f32 0.0, %v572
        %v574 = vpop.f32.mrb[0].mxu0
        %575 = vmatprep.mubr.f32.mxu0 0.0
        %576 = vmatmul.mubr.f32.gmra.mrb[0].mxu0 %v450
        %v577 = vpop.f32.mrb[0].mxu0
        %v578 = vadd.f32 0.0, %v577
        %v579 = vpop.f32.mrb[0].mxu0
        %580 = vmatprep.mubr.f32.mxu0 0.0
        %581 = vmatmul.mubr.f32.gmra.mrb[0].mxu0 %v453
        %v582 = vpop.f32.mrb[0].mxu0
        %v583 = vadd.f32 0.0, %v582
        %v584 = vpop.f32.mrb[0].mxu0
        %585 = vmatprep.mubr.f32.mxu0 0.0
        %586 = vmatmul.mubr.f32.gmra.mrb[0].mxu0 %v456
        %v587 = vpop.f32.mrb[0].mxu0
        %v588 = vadd.f32 0.0, %v587
        %v589 = vpop.f32.mrb[0].mxu0
        %590 = vmatprep.mubr.f32.mxu0 0.0
        %591 = vmatmul.mubr.f32.gmra.mrb[0].mxu0 %v459
        %v592 = vpop.f32.mrb[0].mxu0
        %v593 = vadd.f32 0.0, %v592
        %v594 = vpop.f32.mrb[0].mxu0
        %595 = vmatprep.mubr.f32.mxu0 0.0
        %596 = vmatmul.mubr.f32.gmra.mrb[0].mxu0 %v462
        %v597 = vpop.f32.mrb[0].mxu0
        %v598 = vadd.f32 0.0, %v597
        %v599 = vpop.f32.mrb[0].mxu0
        %600 = vmatprep.mubr.f32.mxu0 0.0
        %601 = vmatmul.mubr.f32.gmra.mrb[0].mxu0 %v465
        %v602 = vpop.f32.mrb[0].mxu0
        %v603 = vadd.f32 0.0, %v602
        %v604 = vpop.f32.mrb[0].mxu0
        %605 = vmatprep.mubr.f32.mxu0 0.0
        %606 = vmatmul.mubr.f32.gmra.mrb[0].mxu0 %v468
        %v607 = vpop.f32.mrb[0].mxu0
        %v608 = vadd.f32 0.0, %v607
        %v609 = vpop.f32.mrb[0].mxu0
        %610 = vmatprep.mubr.f32.mxu0 0.0
        %611 = vmatmul.mubr.f32.gmra.mrb[0].mxu0 %v471
        %v612 = vpop.f32.mrb[0].mxu0
        %v613 = vadd.f32 0.0, %v612
        %v614 = vpop.f32.mrb[0].mxu0
        %615 = vmatprep.mubr.f32.mxu0 0.0
        %616 = vmatmul.mubr.f32.gmra.mrb[0].mxu0 %v474
        %v617 = vpop.f32.mrb[0].mxu0
        %v618 = vadd.f32 0.0, %v617
        %v619 = vpop.f32.mrb[0].mxu0
        %620 = vdwg.mxu0
        %621 = vmatprep.subr.mxu0 0.0
        %622 = vmatpush1.msra.mxu0 %v282
        %623 = vmatprep.subr.mxu0 0.0
        %624 = vmatpush1.msra.mxu0 %v283
        %625 = vmatprep.subr.mxu0 0.0
        %626 = vmatpush1.msra.mxu0 %v284
        %627 = vmatprep.subr.mxu0 0.0
        %628 = vmatpush1.msra.mxu0 %v285
        %629 = vmatprep.subr.mxu0 0.0
        %630 = vmatpush1.msra.mxu0 %v286
        %631 = vmatprep.subr.mxu0 0.0
        %632 = vmatpush1.msra.mxu0 %v287
        %633 = vmatprep.subr.mxu0 0.0
        %634 = vmatpush1.msra.mxu0 %v288
        %635 = vmatprep.subr.mxu0 0.0
        %636 = vmatpush1.msra.mxu0 %v289
        %637 = vmatprep.subr.mxu0 0.0
        %638 = vmatpush1.msra.mxu0 %v290
        %639 = vmatprep.subr.mxu0 0.0
        %640 = vmatpush1.msra.mxu0 %v291
        %641 = vmatprep.subr.mxu0 0.0
        %642 = vmatpush1.msra.mxu0 %v292
        %643 = vmatprep.subr.mxu0 0.0
        %644 = vmatpush1.msra.mxu0 %v293
        %645 = vmatprep.subr.mxu0 0.0
        %646 = vmatpush1.msra.mxu0 %v294
        %647 = vmatprep.subr.mxu0 0.0
        %648 = vmatpush1.msra.mxu0 %v295
        %649 = vmatprep.subr.mxu0 0.0
        %650 = vmatpush1.msra.mxu0 %v296
        %651 = vmatprep.subr.mxu0 0.0
        %652 = vmatpush1.msra.mxu0 %v297
        %653 = vmatprep.subr.mxu0 0.0
        %654 = vmatpush1.msra.mxu0 0.0
        %655 = vmatprep.subr.mxu0 0.0
        %656 = vmatpush1.msra.mxu0 0.0
        %657 = vmatprep.subr.mxu0 0.0
        %658 = vmatpush1.msra.mxu0 0.0
        %659 = vmatprep.subr.mxu0 0.0
        %660 = vmatpush1.msra.mxu0 0.0
        %661 = vmatprep.subr.mxu0 0.0
        %662 = vmatpush1.msra.mxu0 0.0
        %663 = vmatprep.subr.mxu0 0.0
        %664 = vmatpush1.msra.mxu0 0.0
        %665 = vmatprep.subr.mxu0 0.0
        %666 = vmatpush1.msra.mxu0 0.0
        %667 = vmatprep.subr.mxu0 0.0
        %668 = vmatpush1.msra.mxu0 0.0
        %669 = vmatprep.subr.mxu0 0.0
        %670 = vmatpush1.msra.mxu0 0.0
        %671 = vmatprep.subr.mxu0 0.0
        %672 = vmatpush1.msra.mxu0 0.0
        %673 = vmatprep.subr.mxu0 0.0
        %674 = vmatpush1.msra.mxu0 0.0
        %675 = vmatprep.subr.mxu0 0.0
        %676 = vmatpush1.msra.mxu0 0.0
        %677 = vmatprep.subr.mxu0 0.0
        %678 = vmatpush1.msra.mxu0 0.0
        %679 = vmatprep.subr.mxu0 0.0
        %680 = vmatpush1.msra.mxu0 0.0
        %681 = vmatprep.subr.mxu0 0.0
        %682 = vmatpush1.msra.mxu0 0.0
        %683 = vmatprep.subr.mxu0 0.0
        %684 = vmatpush1.msra.mxu0 0.0
        %685 = vmatprep.mubr.f32.mxu0 0.0
        %686 = vmatmul.mubr.f32.gmra.mrb[0].mxu0 %v390
        %v687 = vpop.f32.mrb[0].mxu0
        %v688 = vadd.f32 0.0, %v687
        %v689 = vpop.f32.mrb[0].mxu0
        %690 = vmatprep.mubr.f32.mxu0 0.0
        %691 = vmatmul.mubr.f32.gmra.mrb[0].mxu0 %v395
        %v692 = vpop.f32.mrb[0].mxu0
        %v693 = vadd.f32 0.0, %v692
        %v694 = vpop.f32.mrb[0].mxu0
        %695 = vmatprep.mubr.f32.mxu0 0.0
        %696 = vmatmul.mubr.f32.gmra.mrb[0].mxu0 %v400
        %v697 = vpop.f32.mrb[0].mxu0
        %v698 = vadd.f32 0.0, %v697
        %v699 = vpop.f32.mrb[0].mxu0
        %700 = vmatprep.mubr.f32.mxu0 0.0
        %701 = vmatmul.mubr.f32.gmra.mrb[0].mxu0 %v405
        %v702 = vpop.f32.mrb[0].mxu0
        %v703 = vadd.f32 0.0, %v702
        %v704 = vpop.f32.mrb[0].mxu0
        %705 = vmatprep.mubr.f32.mxu0 0.0
        %706 = vmatmul.mubr.f32.gmra.mrb[0].mxu0 %v410
        %v707 = vpop.f32.mrb[0].mxu0
        %v708 = vadd.f32 0.0, %v707
        %v709 = vpop.f32.mrb[0].mxu0
        %710 = vmatprep.mubr.f32.mxu0 0.0
        %711 = vmatmul.mubr.f32.gmra.mrb[0].mxu0 %v415
        %v712 = vpop.f32.mrb[0].mxu0
        %v713 = vadd.f32 0.0, %v712
        %v714 = vpop.f32.mrb[0].mxu0
        %715 = vmatprep.mubr.f32.mxu0 0.0
        %716 = vmatmul.mubr.f32.gmra.mrb[0].mxu0 %v420
        %v717 = vpop.f32.mrb[0].mxu0
        %v718 = vadd.f32 0.0, %v717
        %v719 = vpop.f32.mrb[0].mxu0
        %720 = vmatprep.mubr.f32.mxu0 0.0
        %721 = vmatmul.mubr.f32.gmra.mrb[0].mxu0 %v425
        %v722 = vpop.f32.mrb[0].mxu0
        %v723 = vadd.f32 0.0, %v722
        %v724 = vpop.f32.mrb[0].mxu0
        %725 = vdwg.mxu0
        %726 = vmatprep.subr.mxu0 0.0
        %727 = vmatpush1.msra.mxu0 %v282
        %728 = vmatprep.subr.mxu0 0.0
        %729 = vmatpush1.msra.mxu0 %v283
        %730 = vmatprep.subr.mxu0 0.0
        %731 = vmatpush1.msra.mxu0 %v284
        %732 = vmatprep.subr.mxu0 0.0
        %733 = vmatpush1.msra.mxu0 %v285
        %734 = vmatprep.subr.mxu0 0.0
        %735 = vmatpush1.msra.mxu0 %v286
        %736 = vmatprep.subr.mxu0 0.0
        %737 = vmatpush1.msra.mxu0 %v287
        %738 = vmatprep.subr.mxu0 0.0
        %739 = vmatpush1.msra.mxu0 %v288
        %740 = vmatprep.subr.mxu0 0.0
        %741 = vmatpush1.msra.mxu0 %v289
        %742 = vmatprep.subr.mxu0 0.0
        %743 = vmatpush1.msra.mxu0 %v290
        %744 = vmatprep.subr.mxu0 0.0
        %745 = vmatpush1.msra.mxu0 %v291
        %746 = vmatprep.subr.mxu0 0.0
        %747 = vmatpush1.msra.mxu0 %v292
        %748 = vmatprep.subr.mxu0 0.0
        %749 = vmatpush1.msra.mxu0 %v293
        %750 = vmatprep.subr.mxu0 0.0
        %751 = vmatpush1.msra.mxu0 %v294
        %752 = vmatprep.subr.mxu0 0.0
        %753 = vmatpush1.msra.mxu0 %v295
        %754 = vmatprep.subr.mxu0 0.0
        %755 = vmatpush1.msra.mxu0 %v296
        %756 = vmatprep.subr.mxu0 0.0
        %757 = vmatpush1.msra.mxu0 %v297
        %758 = vmatprep.subr.mxu0 0.0
        %759 = vmatpush1.msra.mxu0 0.0
        %760 = vmatprep.subr.mxu0 0.0
        %761 = vmatpush1.msra.mxu0 0.0
        %762 = vmatprep.subr.mxu0 0.0
        %763 = vmatpush1.msra.mxu0 0.0
        %764 = vmatprep.subr.mxu0 0.0
        %765 = vmatpush1.msra.mxu0 0.0
        %766 = vmatprep.subr.mxu0 0.0
        %767 = vmatpush1.msra.mxu0 0.0
        %768 = vmatprep.subr.mxu0 0.0
        %769 = vmatpush1.msra.mxu0 0.0
        %770 = vmatprep.subr.mxu0 0.0
        %771 = vmatpush1.msra.mxu0 0.0
        %772 = vmatprep.subr.mxu0 0.0
        %773 = vmatpush1.msra.mxu0 0.0
        %774 = vmatprep.subr.mxu0 0.0
        %775 = vmatpush1.msra.mxu0 0.0
        %776 = vmatprep.subr.mxu0 0.0
        %777 = vmatpush1.msra.mxu0 0.0
        %778 = vmatprep.subr.mxu0 0.0
        %779 = vmatpush1.msra.mxu0 0.0
        %780 = vmatprep.subr.mxu0 0.0
        %781 = vmatpush1.msra.mxu0 0.0
        %782 = vmatprep.subr.mxu0 0.0
        %783 = vmatpush1.msra.mxu0 0.0
        %784 = vmatprep.subr.mxu0 0.0
        %785 = vmatpush1.msra.mxu0 0.0
        %786 = vmatprep.subr.mxu0 0.0
        %787 = vmatpush1.msra.mxu0 0.0
        %788 = vmatprep.subr.mxu0 0.0
        %789 = vmatpush1.msra.mxu0 0.0
        %790 = vmatprep.mubr.f32.mxu0 0.0
        %791 = vmatmul.mubr.f32.gmra.mrb[0].mxu0 %v543
        %v792 = vpop.f32.mrb[0].mxu0
        %v793 = vadd.f32 0.0, %v792
        %v794 = vpop.f32.mrb[0].mxu0
        %795 = vmatprep.mubr.f32.mxu0 0.0
        %796 = vmatmul.mubr.f32.gmra.mrb[0].mxu0 %v548
        %v797 = vpop.f32.mrb[0].mxu0
        %v798 = vadd.f32 0.0, %v797
        %v799 = vpop.f32.mrb[0].mxu0
        %800 = vmatprep.mubr.f32.mxu0 0.0
        %801 = vmatmul.mubr.f32.gmra.mrb[0].mxu0 %v553
        %v802 = vpop.f32.mrb[0].mxu0
        %v803 = vadd.f32 0.0, %v802
        %v804 = vpop.f32.mrb[0].mxu0
        %805 = vmatprep.mubr.f32.mxu0 0.0
        %806 = vmatmul.mubr.f32.gmra.mrb[0].mxu0 %v558
        %v807 = vpop.f32.mrb[0].mxu0
        %v808 = vadd.f32 0.0, %v807
        %v809 = vpop.f32.mrb[0].mxu0
        %810 = vmatprep.mubr.f32.mxu0 0.0
        %811 = vmatmul.mubr.f32.gmra.mrb[0].mxu0 %v563
        %v812 = vpop.f32.mrb[0].mxu0
        %v813 = vadd.f32 0.0, %v812
        %v814 = vpop.f32.mrb[0].mxu0
        %815 = vmatprep.mubr.f32.mxu0 0.0
        %816 = vmatmul.mubr.f32.gmra.mrb[0].mxu0 %v568
        %v817 = vpop.f32.mrb[0].mxu0
        %v818 = vadd.f32 0.0, %v817
        %v819 = vpop.f32.mrb[0].mxu0
        %820 = vmatprep.mubr.f32.mxu0 0.0
        %821 = vmatmul.mubr.f32.gmra.mrb[0].mxu0 %v573
        %v822 = vpop.f32.mrb[0].mxu0
        %v823 = vadd.f32 0.0, %v822
        %v824 = vpop.f32.mrb[0].mxu0
        %825 = vmatprep.mubr.f32.mxu0 0.0
        %826 = vmatmul.mubr.f32.gmra.mrb[0].mxu0 %v578
        %v827 = vpop.f32.mrb[0].mxu0
        %v828 = vadd.f32 0.0, %v827
        %v829 = vpop.f32.mrb[0].mxu0
        %830 = vmatprep.mubr.f32.mxu0 0.0
        %831 = vmatmul.mubr.f32.gmra.mrb[0].mxu0 %v583
        %v832 = vpop.f32.mrb[0].mxu0
        %v833 = vadd.f32 0.0, %v832
        %v834 = vpop.f32.mrb[0].mxu0
        %835 = vmatprep.mubr.f32.mxu0 0.0
        %836 = vmatmul.mubr.f32.gmra.mrb[0].mxu0 %v588
        %v837 = vpop.f32.mrb[0].mxu0
        %v838 = vadd.f32 0.0, %v837
        %v839 = vpop.f32.mrb[0].mxu0
        %840 = vmatprep.mubr.f32.mxu0 0.0
        %841 = vmatmul.mubr.f32.gmra.mrb[0].mxu0 %v593
        %v842 = vpop.f32.mrb[0].mxu0
        %v843 = vadd.f32 0.0, %v842
        %v844 = vpop.f32.mrb[0].mxu0
        %845 = vmatprep.mubr.f32.mxu0 0.0
        %846 = vmatmul.mubr.f32.gmra.mrb[0].mxu0 %v598
        %v847 = vpop.f32.mrb[0].mxu0
        %v848 = vadd.f32 0.0, %v847
        %v849 = vpop.f32.mrb[0].mxu0
        %850 = vmatprep.mubr.f32.mxu0 0.0
        %851 = vmatmul.mubr.f32.gmra.mrb[0].mxu0 %v603
        %v852 = vpop.f32.mrb[0].mxu0
        %v853 = vadd.f32 0.0, %v852
        %v854 = vpop.f32.mrb[0].mxu0
        %855 = vmatprep.mubr.f32.mxu0 0.0
        %856 = vmatmul.mubr.f32.gmra.mrb[0].mxu0 %v608
        %v857 = vpop.f32.mrb[0].mxu0
        %v858 = vadd.f32 0.0, %v857
        %v859 = vpop.f32.mrb[0].mxu0
        %860 = vmatprep.mubr.f32.mxu0 0.0
        %861 = vmatmul.mubr.f32.gmra.mrb[0].mxu0 %v613
        %v862 = vpop.f32.mrb[0].mxu0
        %v863 = vadd.f32 0.0, %v862
        %v864 = vpop.f32.mrb[0].mxu0
        %865 = vmatprep.mubr.f32.mxu0 0.0
        %866 = vmatmul.mubr.f32.gmra.mrb[0].mxu0 %v618
        %v867 = vpop.f32.mrb[0].mxu0
        %v868 = vadd.f32 0.0, %v867
        %v869 = vpop.f32.mrb[0].mxu0
        %870 = vdwg.mxu0
        %887 = vrot.lane.b32.xlu0 %v793, 124
        %v888 = vpop.permute.xlu0 %887
        %889 = vrot.lane.b32.xlu0 %v798, 124
        %v890 = vpop.permute.xlu0 %889
        %891 = vrot.lane.b32.xlu0 %v803, 124
        %v892 = vpop.permute.xlu0 %891
        %893 = vrot.lane.b32.xlu0 %v808, 124
        %v894 = vpop.permute.xlu0 %893
        %895 = vrot.lane.b32.xlu0 %v813, 124
        %v896 = vpop.permute.xlu0 %895
        %897 = vrot.lane.b32.xlu0 %v818, 124
        %v898 = vpop.permute.xlu0 %897
        %899 = vrot.lane.b32.xlu0 %v823, 124
        %v900 = vpop.permute.xlu0 %899
        %901 = vrot.lane.b32.xlu0 %v828, 124
        %v902 = vpop.permute.xlu0 %901
        %903 = vrot.lane.b32.xlu0 %v833, 124
        %v904 = vpop.permute.xlu0 %903
        %905 = vrot.lane.b32.xlu0 %v838, 124
        %v906 = vpop.permute.xlu0 %905
        %907 = vrot.lane.b32.xlu0 %v843, 124
        %v908 = vpop.permute.xlu0 %907
        %909 = vrot.lane.b32.xlu0 %v848, 124
        %v910 = vpop.permute.xlu0 %909
        %911 = vrot.lane.b32.xlu0 %v853, 124
        %v912 = vpop.permute.xlu0 %911
        %913 = vrot.lane.b32.xlu0 %v858, 124
        %v914 = vpop.permute.xlu0 %913
        %915 = vrot.lane.b32.xlu0 %v863, 124
        %v916 = vpop.permute.xlu0 %915
        %917 = vrot.lane.b32.xlu0 %v868, 124
        %v918 = vpop.permute.xlu0 %917
        %935 = vxpose.xlu0.b32.start [1/16] %v888, 128
        %936 = vxpose.xlu0.b32.cont [2/16] %v890, 128
        %937 = vxpose.xlu0.b32.cont [3/16] %v892, 128
        %938 = vxpose.xlu0.b32.cont [4/16] %v894, 128
        %939 = vxpose.xlu0.b32.cont [5/16] %v896, 128
        %940 = vxpose.xlu0.b32.cont [6/16] %v898, 128
        %941 = vxpose.xlu0.b32.cont [7/16] %v900, 128
        %942 = vxpose.xlu0.b32.cont [8/16] %v902, 128
        %943 = vxpose.xlu0.b32.cont [9/16] %v904, 128
        %944 = vxpose.xlu0.b32.cont [10/16] %v906, 128
        %945 = vxpose.xlu0.b32.cont [11/16] %v908, 128
        %946 = vxpose.xlu0.b32.cont [12/16] %v910, 128
        %947 = vxpose.xlu0.b32.cont [13/16] %v912, 128
        %948 = vxpose.xlu0.b32.cont [14/16] %v914, 128
        %949 = vxpose.xlu0.b32.cont [15/16] %v916, 128
        %950 = vxpose.xlu0.b32.end [16/16] %v918, 128
        %v951 = vpop.trf.xlu0
        %v952 = vpop.trf.xlu0
        %v953 = vpop.trf.xlu0
        %v954 = vpop.trf.xlu0
        %v955 = vpop.trf.xlu0
        %v956 = vpop.trf.xlu0
        %v957 = vpop.trf.xlu0
        %v958 = vpop.trf.xlu0
        %v959 = vpop.trf.xlu0
        %v960 = vpop.trf.xlu0
        %v961 = vpop.trf.xlu0
        %v962 = vpop.trf.xlu0
        %v963 = vpop.trf.xlu0
        %v964 = vpop.trf.xlu0
        %v965 = vpop.trf.xlu0
        %v966 = vpop.trf.xlu0
        %968 = vset.pattern.permute.xlu0 0
        %969 = vperm.xlu0 %968, %v688
        %v970 = vpop.permute.xlu0 %969
        %973 = vset.pattern.permute.xlu0 0
        %974 = vperm.xlu0 %973, %v693
        %v975 = vpop.permute.xlu0 %974
        %978 = vset.pattern.permute.xlu0 0
        %979 = vperm.xlu0 %978, %v698
        %v980 = vpop.permute.xlu0 %979
        %983 = vset.pattern.permute.xlu0 0
        %984 = vperm.xlu0 %983, %v703
        %v985 = vpop.permute.xlu0 %984
        %988 = vset.pattern.permute.xlu0 0
        %989 = vperm.xlu0 %988, %v708
        %v990 = vpop.permute.xlu0 %989
        %993 = vset.pattern.permute.xlu0 0
        %994 = vperm.xlu0 %993, %v713
        %v995 = vpop.permute.xlu0 %994
        %998 = vset.pattern.permute.xlu0 0
        %999 = vperm.xlu0 %998, %v718
        %v1000 = vpop.permute.xlu0 %999
        %1003 = vset.pattern.permute.xlu0 0
        %1004 = vperm.xlu0 %1003, %v723
        %v1005 = vpop.permute.xlu0 %1004
        %v1007 = vlaneseq
        %v1008 = vshrl.u32 %v1007, 7
        %v1009 = vsub.s32 0, %v1008
        %v1010 = vrot.slane %v951, %v1009
        %v1011 = vadd.f32 %v970, %v1010
        %v1012 = vadd.f32 %v975, %v1010
        %v1013 = vadd.f32 %v980, %v1010
        %v1014 = vadd.f32 %v985, %v1010
        %v1015 = vadd.f32 %v990, %v1010
        %v1016 = vadd.f32 %v995, %v1010
        %v1017 = vadd.f32 %v1000, %v1010
        %v1018 = vadd.f32 %v1005, %v1010
        %vm1019 = vcmp.gt.f32.partialorder %v1011, 0.0
        %vm1020 = vcmp.gt.f32.partialorder %v1012, 0.0
        %vm1021 = vcmp.gt.f32.partialorder %v1013, 0.0
        %vm1022 = vcmp.gt.f32.partialorder %v1014, 0.0
        %vm1023 = vcmp.gt.f32.partialorder %v1015, 0.0
        %vm1024 = vcmp.gt.f32.partialorder %v1016, 0.0
        %vm1025 = vcmp.gt.f32.partialorder %v1017, 0.0
        %vm1026 = vcmp.gt.f32.partialorder %v1018, 0.0
        %v1027 = vmul.f32 %v1011, 0.2
        %v1028 = vmul.f32 %v1012, 0.2
        %v1029 = vmul.f32 %v1013, 0.2
        %v1030 = vmul.f32 %v1014, 0.2
        %v1031 = vmul.f32 %v1015, 0.2
        %v1032 = vmul.f32 %v1016, 0.2
        %v1033 = vmul.f32 %v1017, 0.2
        %v1034 = vmul.f32 %v1018, 0.2
        %v1035 = vsel %vm1019, %v1011, %v1027
        %v1036 = vsel %vm1020, %v1012, %v1028
        %v1037 = vsel %vm1021, %v1013, %v1029
        %v1038 = vsel %vm1022, %v1014, %v1030
        %v1039 = vsel %vm1023, %v1015, %v1031
        %v1040 = vsel %vm1024, %v1016, %v1032
        %v1041 = vsel %vm1025, %v1017, %v1033
        %v1042 = vsel %vm1026, %v1018, %v1034
        %vm1043 = vcmp.gt.f32.partialorder %v272, 0.0
        %vm1044 = vcmp.gt.f32.partialorder %v273, 0.0
        %vm1045 = vcmp.gt.f32.partialorder %v274, 0.0
        %vm1046 = vcmp.gt.f32.partialorder %v275, 0.0
        %vm1047 = vcmp.gt.f32.partialorder %v276, 0.0
        %vm1048 = vcmp.gt.f32.partialorder %v277, 0.0
        %vm1049 = vcmp.gt.f32.partialorder %v278, 0.0
        %vm1050 = vcmp.gt.f32.partialorder %v279, 0.0
        %v1051 = vsel %vm1043, %v1035, 9e-15
        %v1052 = vsel %vm1044, %v1036, 9e-15
        %v1053 = vsel %vm1045, %v1037, 9e-15
        %v1054 = vsel %vm1046, %v1038, 9e-15
        %v1055 = vsel %vm1047, %v1039, 9e-15
        %v1056 = vsel %vm1048, %v1040, 9e-15
        %v1057 = vsel %vm1049, %v1041, 9e-15
        %v1058 = vsel %vm1050, %v1042, 9e-15
        %1059 = vmax.xlane.f32.xlu0 %v1051
        %v1060 = vpop.xlane.xlu0 %1059
        %1061 = vmax.xlane.f32.xlu0 %v1052
        %v1062 = vpop.xlane.xlu0 %1061
        %1063 = vmax.xlane.f32.xlu0 %v1053
        %v1064 = vpop.xlane.xlu0 %1063
        %1065 = vmax.xlane.f32.xlu0 %v1054
        %v1066 = vpop.xlane.xlu0 %1065
        %1067 = vmax.xlane.f32.xlu0 %v1055
        %v1068 = vpop.xlane.xlu0 %1067
        %1069 = vmax.xlane.f32.xlu0 %v1056
        %v1070 = vpop.xlane.xlu0 %1069
        %1071 = vmax.xlane.f32.xlu0 %v1057
        %v1072 = vpop.xlane.xlu0 %1071
        %1073 = vmax.xlane.f32.xlu0 %v1058
        %v1074 = vpop.xlane.xlu0 %1073
        %v1075 = vsub.f32 %v1051, %v1060
        %v1076 = vsub.f32 %v1052, %v1062
        %v1077 = vsub.f32 %v1053, %v1064
        %v1078 = vsub.f32 %v1054, %v1066
        %v1079 = vsub.f32 %v1055, %v1068
        %v1080 = vsub.f32 %v1056, %v1070
        %v1081 = vsub.f32 %v1057, %v1072
        %v1082 = vsub.f32 %v1058, %v1074
        %v1083 = vmul.f32 %v1075, 1.442695
        %v1084 = vpow.pop %v1083
        %v1085 = vmul.f32 %v1076, 1.442695
        %v1086 = vpow.pop %v1085
        %v1087 = vmul.f32 %v1077, 1.442695
        %v1088 = vpow.pop %v1087
        %v1089 = vmul.f32 %v1078, 1.442695
        %v1090 = vpow.pop %v1089
        %v1091 = vmul.f32 %v1079, 1.442695
        %v1092 = vpow.pop %v1091
        %v1093 = vmul.f32 %v1080, 1.442695
        %v1094 = vpow.pop %v1093
        %v1095 = vmul.f32 %v1081, 1.442695
        %v1096 = vpow.pop %v1095
        %v1097 = vmul.f32 %v1082, 1.442695
        %v1098 = vpow.pop %v1097
        %1099 = vadd.xlane.f32.xlu0 %v1084
        %v1100 = vpop.xlane.xlu0 %1099
        %1101 = vadd.xlane.f32.xlu0 %v1086
        %v1102 = vpop.xlane.xlu0 %1101
        %1103 = vadd.xlane.f32.xlu0 %v1088
        %v1104 = vpop.xlane.xlu0 %1103
        %1105 = vadd.xlane.f32.xlu0 %v1090
        %v1106 = vpop.xlane.xlu0 %1105
        %1107 = vadd.xlane.f32.xlu0 %v1092
        %v1108 = vpop.xlane.xlu0 %1107
        %1109 = vadd.xlane.f32.xlu0 %v1094
        %v1110 = vpop.xlane.xlu0 %1109
        %1111 = vadd.xlane.f32.xlu0 %v1096
        %v1112 = vpop.xlane.xlu0 %1111
        %1113 = vadd.xlane.f32.xlu0 %v1098
        %v1114 = vpop.xlane.xlu0 %1113
        %v1115 = vrcp.pop %v1100
        %v1116 = vrcp.pop %v1102
        %v1117 = vrcp.pop %v1104
        %v1118 = vrcp.pop %v1106
        %v1119 = vrcp.pop %v1108
        %v1120 = vrcp.pop %v1110
        %v1121 = vrcp.pop %v1112
        %v1122 = vrcp.pop %v1114
        %v1123 = vmul.f32 %v1100, %v1115
        %v1124 = vmul.f32 %v1102, %v1116
        %v1125 = vmul.f32 %v1104, %v1117
        %v1126 = vmul.f32 %v1106, %v1118
        %v1127 = vmul.f32 %v1108, %v1119
        %v1128 = vmul.f32 %v1110, %v1120
        %v1129 = vmul.f32 %v1112, %v1121
        %v1130 = vmul.f32 %v1114, %v1122
        %v1131 = vsub.f32 2.0, %v1123
        %v1132 = vsub.f32 2.0, %v1124
        %v1133 = vsub.f32 2.0, %v1125
        %v1134 = vsub.f32 2.0, %v1126
        %v1135 = vsub.f32 2.0, %v1127
        %v1136 = vsub.f32 2.0, %v1128
        %v1137 = vsub.f32 2.0, %v1129
        %v1138 = vsub.f32 2.0, %v1130
        %v1139 = vmul.f32 %v1115, %v1131
        %v1140 = vmul.f32 %v1116, %v1132
        %v1141 = vmul.f32 %v1117, %v1133
        %v1142 = vmul.f32 %v1118, %v1134
        %v1143 = vmul.f32 %v1119, %v1135
        %v1144 = vmul.f32 %v1120, %v1136
        %v1145 = vmul.f32 %v1121, %v1137
        %v1146 = vmul.f32 %v1122, %v1138
        %v1147 = vmul.f32 %v1084, %v1139
        %v1148 = vmul.f32 %v1086, %v1140
        %v1149 = vmul.f32 %v1088, %v1141
        %v1150 = vmul.f32 %v1090, %v1142
        %v1151 = vmul.f32 %v1092, %v1143
        %v1152 = vmul.f32 %v1094, %v1144
        %v1153 = vmul.f32 %v1096, %v1145
        %v1154 = vmul.f32 %v1098, %v1146
        %1155 = vmatprep.subr.mxu0 0.0
        %1156 = vmatpush1.msra.mxu0 %v543
        %1157 = vmatprep.subr.mxu0 0.0
        %1158 = vmatpush1.msra.mxu0 %v548
        %1159 = vmatprep.subr.mxu0 0.0
        %1160 = vmatpush1.msra.mxu0 %v553
        %1161 = vmatprep.subr.mxu0 0.0
        %1162 = vmatpush1.msra.mxu0 %v558
        %1163 = vmatprep.subr.mxu0 0.0
        %1164 = vmatpush1.msra.mxu0 %v563
        %1165 = vmatprep.subr.mxu0 0.0
        %1166 = vmatpush1.msra.mxu0 %v568
        %1167 = vmatprep.subr.mxu0 0.0
        %1168 = vmatpush1.msra.mxu0 %v573
        %1169 = vmatprep.subr.mxu0 0.0
        %1170 = vmatpush1.msra.mxu0 %v578
        %1171 = vmatprep.subr.mxu0 0.0
        %1172 = vmatpush1.msra.mxu0 %v583
        %1173 = vmatprep.subr.mxu0 0.0
        %1174 = vmatpush1.msra.mxu0 %v588
        %1175 = vmatprep.subr.mxu0 0.0
        %1176 = vmatpush1.msra.mxu0 %v593
        %1177 = vmatprep.subr.mxu0 0.0
        %1178 = vmatpush1.msra.mxu0 %v598
        %1179 = vmatprep.subr.mxu0 0.0
        %1180 = vmatpush1.msra.mxu0 %v603
        %1181 = vmatprep.subr.mxu0 0.0
        %1182 = vmatpush1.msra.mxu0 %v608
        %1183 = vmatprep.subr.mxu0 0.0
        %1184 = vmatpush1.msra.mxu0 %v613
        %1185 = vmatprep.subr.mxu0 0.0
        %1186 = vmatpush1.msra.mxu0 %v618
        %1187 = vmatprep.subr.mxu0 0.0
        %1188 = vmatpush1.msra.mxu0 0.0
        %1189 = vmatprep.subr.mxu0 0.0
        %1190 = vmatpush1.msra.mxu0 0.0
        %1191 = vmatprep.subr.mxu0 0.0
        %1192 = vmatpush1.msra.mxu0 0.0
        %1193 = vmatprep.subr.mxu0 0.0
        %1194 = vmatpush1.msra.mxu0 0.0
        %1195 = vmatprep.subr.mxu0 0.0
        %1196 = vmatpush1.msra.mxu0 0.0
        %1197 = vmatprep.subr.mxu0 0.0
        %1198 = vmatpush1.msra.mxu0 0.0
        %1199 = vmatprep.subr.mxu0 0.0
        %1200 = vmatpush1.msra.mxu0 0.0
        %1201 = vmatprep.subr.mxu0 0.0
        %1202 = vmatpush1.msra.mxu0 0.0
        %1203 = vmatprep.subr.mxu0 0.0
        %1204 = vmatpush1.msra.mxu0 0.0
        %1205 = vmatprep.subr.mxu0 0.0
        %1206 = vmatpush1.msra.mxu0 0.0
        %1207 = vmatprep.subr.mxu0 0.0
        %1208 = vmatpush1.msra.mxu0 0.0
        %1209 = vmatprep.subr.mxu0 0.0
        %1210 = vmatpush1.msra.mxu0 0.0
        %1211 = vmatprep.subr.mxu0 0.0
        %1212 = vmatpush1.msra.mxu0 0.0
        %1213 = vmatprep.subr.mxu0 0.0
        %1214 = vmatpush1.msra.mxu0 0.0
        %1215 = vmatprep.subr.mxu0 0.0
        %1216 = vmatpush1.msra.mxu0 0.0
        %1217 = vmatprep.subr.mxu0 0.0
        %1218 = vmatpush1.msra.mxu0 0.0
        %1219 = vmatprep.mubr.f32.mxu0 0.0
        %1220 = vmatmul.mubr.f32.gmra.mrb[0].mxu0 %v1147
        %v1221 = vpop.f32.mrb[0].mxu0
        %v1222 = vadd.f32 0.0, %v1221
        %v1223 = vpop.f32.mrb[0].mxu0
        %1224 = vmatprep.mubr.f32.mxu0 0.0
        %1225 = vmatmul.mubr.f32.gmra.mrb[0].mxu0 %v1148
        %v1226 = vpop.f32.mrb[0].mxu0
        %v1227 = vadd.f32 0.0, %v1226
        %v1228 = vpop.f32.mrb[0].mxu0
        %1229 = vmatprep.mubr.f32.mxu0 0.0
        %1230 = vmatmul.mubr.f32.gmra.mrb[0].mxu0 %v1149
        %v1231 = vpop.f32.mrb[0].mxu0
        %v1232 = vadd.f32 0.0, %v1231
        %v1233 = vpop.f32.mrb[0].mxu0
        %1234 = vmatprep.mubr.f32.mxu0 0.0
        %1235 = vmatmul.mubr.f32.gmra.mrb[0].mxu0 %v1150
        %v1236 = vpop.f32.mrb[0].mxu0
        %v1237 = vadd.f32 0.0, %v1236
        %v1238 = vpop.f32.mrb[0].mxu0
        %1239 = vmatprep.mubr.f32.mxu0 0.0
        %1240 = vmatmul.mubr.f32.gmra.mrb[0].mxu0 %v1151
        %v1241 = vpop.f32.mrb[0].mxu0
        %v1242 = vadd.f32 0.0, %v1241
        %v1243 = vpop.f32.mrb[0].mxu0
        %1244 = vmatprep.mubr.f32.mxu0 0.0
        %1245 = vmatmul.mubr.f32.gmra.mrb[0].mxu0 %v1152
        %v1246 = vpop.f32.mrb[0].mxu0
        %v1247 = vadd.f32 0.0, %v1246
        %v1248 = vpop.f32.mrb[0].mxu0
        %1249 = vmatprep.mubr.f32.mxu0 0.0
        %1250 = vmatmul.mubr.f32.gmra.mrb[0].mxu0 %v1153
        %v1251 = vpop.f32.mrb[0].mxu0
        %v1252 = vadd.f32 0.0, %v1251
        %v1253 = vpop.f32.mrb[0].mxu0
        %1254 = vmatprep.mubr.f32.mxu0 0.0
        %1255 = vmatmul.mubr.f32.gmra.mrb[0].mxu0 %v1154
        %v1256 = vpop.f32.mrb[0].mxu0
        %v1257 = vadd.f32 0.0, %v1256
        %v1258 = vpop.f32.mrb[0].mxu0
        %1259 = vdwg.mxu0
        %vm1260 = vcmp.gt.f32.partialorder %v1222, 0.0
        %vm1261 = vcmp.gt.f32.partialorder %v1227, 0.0
        %vm1262 = vcmp.gt.f32.partialorder %v1232, 0.0
        %vm1263 = vcmp.gt.f32.partialorder %v1237, 0.0
        %vm1264 = vcmp.gt.f32.partialorder %v1242, 0.0
        %vm1265 = vcmp.gt.f32.partialorder %v1247, 0.0
        %vm1266 = vcmp.gt.f32.partialorder %v1252, 0.0
        %vm1267 = vcmp.gt.f32.partialorder %v1257, 0.0
        %v1268 = vmin.f32 %v1222, 0.0
        %v1269 = vmin.f32 %v1227, 0.0
        %v1270 = vmin.f32 %v1232, 0.0
        %v1271 = vmin.f32 %v1237, 0.0
        %v1272 = vmin.f32 %v1242, 0.0
        %v1273 = vmin.f32 %v1247, 0.0
        %v1274 = vmin.f32 %v1252, 0.0
        %v1275 = vmin.f32 %v1257, 0.0
        %v1276 = vmul.f32 %v1268, 1.442695
        %v1277 = vpow.pop %v1276
        %v1278 = vmul.f32 %v1269, 1.442695
        %v1279 = vpow.pop %v1278
        %v1280 = vmul.f32 %v1270, 1.442695
        %v1281 = vpow.pop %v1280
        %v1282 = vmul.f32 %v1271, 1.442695
        %v1283 = vpow.pop %v1282
        %v1284 = vmul.f32 %v1272, 1.442695
        %v1285 = vpow.pop %v1284
        %v1286 = vmul.f32 %v1273, 1.442695
        %v1287 = vpow.pop %v1286
        %v1288 = vmul.f32 %v1274, 1.442695
        %v1289 = vpow.pop %v1288
        %v1290 = vmul.f32 %v1275, 1.442695
        %v1291 = vpow.pop %v1290
        %v1292 = vsub.f32 %v1277, 1.0
        %v1293 = vsub.f32 %v1279, 1.0
        %v1294 = vsub.f32 %v1281, 1.0
        %v1295 = vsub.f32 %v1283, 1.0
        %v1296 = vsub.f32 %v1285, 1.0
        %v1297 = vsub.f32 %v1287, 1.0
        %v1298 = vsub.f32 %v1289, 1.0
        %v1299 = vsub.f32 %v1291, 1.0
        %v1300 = vsel %vm1260, %v1222, %v1292
        %v1301 = vsel %vm1261, %v1227, %v1293
        %v1302 = vsel %vm1262, %v1232, %v1294
        %v1303 = vsel %vm1263, %v1237, %v1295
        %v1304 = vsel %vm1264, %v1242, %v1296
        %v1305 = vsel %vm1265, %v1247, %v1297
        %v1306 = vsel %vm1266, %v1252, %v1298
        %v1307 = vsel %vm1267, %v1257, %v1299
        %1308 = vset.pattern.permute.xlu0 1
        %1309 = vperm.xlu0 %1308, %v688
        %v1310 = vpop.permute.xlu0 %1309
        %1312 = vset.pattern.permute.xlu0 1
        %1313 = vperm.xlu0 %1312, %v693
        %v1314 = vpop.permute.xlu0 %1313
        %1316 = vset.pattern.permute.xlu0 1
        %1317 = vperm.xlu0 %1316, %v698
        %v1318 = vpop.permute.xlu0 %1317
        %1320 = vset.pattern.permute.xlu0 1
        %1321 = vperm.xlu0 %1320, %v703
        %v1322 = vpop.permute.xlu0 %1321
        %1324 = vset.pattern.permute.xlu0 1
        %1325 = vperm.xlu0 %1324, %v708
        %v1326 = vpop.permute.xlu0 %1325
        %1328 = vset.pattern.permute.xlu0 1
        %1329 = vperm.xlu0 %1328, %v713
        %v1330 = vpop.permute.xlu0 %1329
        %1332 = vset.pattern.permute.xlu0 1
        %1333 = vperm.xlu0 %1332, %v718
        %v1334 = vpop.permute.xlu0 %1333
        %1336 = vset.pattern.permute.xlu0 1
        %1337 = vperm.xlu0 %1336, %v723
        %v1338 = vpop.permute.xlu0 %1337
        %v1340 = vlaneseq
        %v1341 = vshrl.u32 %v1340, 7
        %v1342 = vsub.s32 1, %v1341
        %v1343 = vrot.slane %v951, %v1342
        %v1344 = vadd.f32 %v1310, %v1343
        %v1345 = vadd.f32 %v1314, %v1343
        %v1346 = vadd.f32 %v1318, %v1343
        %v1347 = vadd.f32 %v1322, %v1343
        %v1348 = vadd.f32 %v1326, %v1343
        %v1349 = vadd.f32 %v1330, %v1343
        %v1350 = vadd.f32 %v1334, %v1343
        %v1351 = vadd.f32 %v1338, %v1343
        %vm1352 = vcmp.gt.f32.partialorder %v1344, 0.0
        %vm1353 = vcmp.gt.f32.partialorder %v1345, 0.0
        %vm1354 = vcmp.gt.f32.partialorder %v1346, 0.0
        %vm1355 = vcmp.gt.f32.partialorder %v1347, 0.0
        %vm1356 = vcmp.gt.f32.partialorder %v1348, 0.0
        %vm1357 = vcmp.gt.f32.partialorder %v1349, 0.0
        %vm1358 = vcmp.gt.f32.partialorder %v1350, 0.0
        %vm1359 = vcmp.gt.f32.partialorder %v1351, 0.0
        %v1360 = vmul.f32 %v1344, 0.2
        %v1361 = vmul.f32 %v1345, 0.2
        %v1362 = vmul.f32 %v1346, 0.2
        %v1363 = vmul.f32 %v1347, 0.2
        %v1364 = vmul.f32 %v1348, 0.2
        %v1365 = vmul.f32 %v1349, 0.2
        %v1366 = vmul.f32 %v1350, 0.2
        %v1367 = vmul.f32 %v1351, 0.2
        %v1368 = vsel %vm1352, %v1344, %v1360
        %v1369 = vsel %vm1353, %v1345, %v1361
        %v1370 = vsel %vm1354, %v1346, %v1362
        %v1371 = vsel %vm1355, %v1347, %v1363
        %v1372 = vsel %vm1356, %v1348, %v1364
        %v1373 = vsel %vm1357, %v1349, %v1365
        %v1374 = vsel %vm1358, %v1350, %v1366
        %v1375 = vsel %vm1359, %v1351, %v1367
        %v1376 = vsel %vm1043, %v1368, 9e-15
        %v1377 = vsel %vm1044, %v1369, 9e-15
        %v1378 = vsel %vm1045, %v1370, 9e-15
        %v1379 = vsel %vm1046, %v1371, 9e-15
        %v1380 = vsel %vm1047, %v1372, 9e-15
        %v1381 = vsel %vm1048, %v1373, 9e-15
        %v1382 = vsel %vm1049, %v1374, 9e-15
        %v1383 = vsel %vm1050, %v1375, 9e-15
        %1384 = vmax.xlane.f32.xlu0 %v1376
        %v1385 = vpop.xlane.xlu0 %1384
        %1386 = vmax.xlane.f32.xlu0 %v1377
        %v1387 = vpop.xlane.xlu0 %1386
        %1388 = vmax.xlane.f32.xlu0 %v1378
        %v1389 = vpop.xlane.xlu0 %1388
        %1390 = vmax.xlane.f32.xlu0 %v1379
        %v1391 = vpop.xlane.xlu0 %1390
        %1392 = vmax.xlane.f32.xlu0 %v1380
        %v1393 = vpop.xlane.xlu0 %1392
        %1394 = vmax.xlane.f32.xlu0 %v1381
        %v1395 = vpop.xlane.xlu0 %1394
        %1396 = vmax.xlane.f32.xlu0 %v1382
        %v1397 = vpop.xlane.xlu0 %1396
        %1398 = vmax.xlane.f32.xlu0 %v1383
        %v1399 = vpop.xlane.xlu0 %1398
        %v1400 = vsub.f32 %v1376, %v1385
        %v1401 = vsub.f32 %v1377, %v1387
        %v1402 = vsub.f32 %v1378, %v1389
        %v1403 = vsub.f32 %v1379, %v1391
        %v1404 = vsub.f32 %v1380, %v1393
        %v1405 = vsub.f32 %v1381, %v1395
        %v1406 = vsub.f32 %v1382, %v1397
        %v1407 = vsub.f32 %v1383, %v1399
        %v1408 = vmul.f32 %v1400, 1.442695
        %v1409 = vpow.pop %v1408
        %v1410 = vmul.f32 %v1401, 1.442695
        %v1411 = vpow.pop %v1410
        %v1412 = vmul.f32 %v1402, 1.442695
        %v1413 = vpow.pop %v1412
        %v1414 = vmul.f32 %v1403, 1.442695
        %v1415 = vpow.pop %v1414
        %v1416 = vmul.f32 %v1404, 1.442695
        %v1417 = vpow.pop %v1416
        %v1418 = vmul.f32 %v1405, 1.442695
        %v1419 = vpow.pop %v1418
        %v1420 = vmul.f32 %v1406, 1.442695
        %v1421 = vpow.pop %v1420
        %v1422 = vmul.f32 %v1407, 1.442695
        %v1423 = vpow.pop %v1422
        %1424 = vadd.xlane.f32.xlu0 %v1409
        %v1425 = vpop.xlane.xlu0 %1424
        %1426 = vadd.xlane.f32.xlu0 %v1411
        %v1427 = vpop.xlane.xlu0 %1426
        %1428 = vadd.xlane.f32.xlu0 %v1413
        %v1429 = vpop.xlane.xlu0 %1428
        %1430 = vadd.xlane.f32.xlu0 %v1415
        %v1431 = vpop.xlane.xlu0 %1430
        %1432 = vadd.xlane.f32.xlu0 %v1417
        %v1433 = vpop.xlane.xlu0 %1432
        %1434 = vadd.xlane.f32.xlu0 %v1419
        %v1435 = vpop.xlane.xlu0 %1434
        %1436 = vadd.xlane.f32.xlu0 %v1421
        %v1437 = vpop.xlane.xlu0 %1436
        %1438 = vadd.xlane.f32.xlu0 %v1423
        %v1439 = vpop.xlane.xlu0 %1438
        %v1440 = vrcp.pop %v1425
        %v1441 = vrcp.pop %v1427
        %v1442 = vrcp.pop %v1429
        %v1443 = vrcp.pop %v1431
        %v1444 = vrcp.pop %v1433
        %v1445 = vrcp.pop %v1435
        %v1446 = vrcp.pop %v1437
        %v1447 = vrcp.pop %v1439
        %v1448 = vmul.f32 %v1425, %v1440
        %v1449 = vmul.f32 %v1427, %v1441
        %v1450 = vmul.f32 %v1429, %v1442
        %v1451 = vmul.f32 %v1431, %v1443
        %v1452 = vmul.f32 %v1433, %v1444
        %v1453 = vmul.f32 %v1435, %v1445
        %v1454 = vmul.f32 %v1437, %v1446
        %v1455 = vmul.f32 %v1439, %v1447
        %v1456 = vsub.f32 2.0, %v1448
        %v1457 = vsub.f32 2.0, %v1449
        %v1458 = vsub.f32 2.0, %v1450
        %v1459 = vsub.f32 2.0, %v1451
        %v1460 = vsub.f32 2.0, %v1452
        %v1461 = vsub.f32 2.0, %v1453
        %v1462 = vsub.f32 2.0, %v1454
        %v1463 = vsub.f32 2.0, %v1455
        %v1464 = vmul.f32 %v1440, %v1456
        %v1465 = vmul.f32 %v1441, %v1457
        %v1466 = vmul.f32 %v1442, %v1458
        %v1467 = vmul.f32 %v1443, %v1459
        %v1468 = vmul.f32 %v1444, %v1460
        %v1469 = vmul.f32 %v1445, %v1461
        %v1470 = vmul.f32 %v1446, %v1462
        %v1471 = vmul.f32 %v1447, %v1463
        %v1472 = vmul.f32 %v1409, %v1464
        %v1473 = vmul.f32 %v1411, %v1465
        %v1474 = vmul.f32 %v1413, %v1466
        %v1475 = vmul.f32 %v1415, %v1467
        %v1476 = vmul.f32 %v1417, %v1468
        %v1477 = vmul.f32 %v1419, %v1469
        %v1478 = vmul.f32 %v1421, %v1470
        %v1479 = vmul.f32 %v1423, %v1471
        %1496 = vrot.lane.b32.xlu0 %v543, 96
        %v1497 = vpop.permute.xlu0 %1496
        %1498 = vrot.lane.b32.xlu0 %v548, 96
        %v1499 = vpop.permute.xlu0 %1498
        %1500 = vrot.lane.b32.xlu0 %v553, 96
        %v1501 = vpop.permute.xlu0 %1500
        %1502 = vrot.lane.b32.xlu0 %v558, 96
        %v1503 = vpop.permute.xlu0 %1502
        %1504 = vrot.lane.b32.xlu0 %v563, 96
        %v1505 = vpop.permute.xlu0 %1504
        %1506 = vrot.lane.b32.xlu0 %v568, 96
        %v1507 = vpop.permute.xlu0 %1506
        %1508 = vrot.lane.b32.xlu0 %v573, 96
        %v1509 = vpop.permute.xlu0 %1508
        %1510 = vrot.lane.b32.xlu0 %v578, 96
        %v1511 = vpop.permute.xlu0 %1510
        %1512 = vrot.lane.b32.xlu0 %v583, 96
        %v1513 = vpop.permute.xlu0 %1512
        %1514 = vrot.lane.b32.xlu0 %v588, 96
        %v1515 = vpop.permute.xlu0 %1514
        %1516 = vrot.lane.b32.xlu0 %v593, 96
        %v1517 = vpop.permute.xlu0 %1516
        %1518 = vrot.lane.b32.xlu0 %v598, 96
        %v1519 = vpop.permute.xlu0 %1518
        %1520 = vrot.lane.b32.xlu0 %v603, 96
        %v1521 = vpop.permute.xlu0 %1520
        %1522 = vrot.lane.b32.xlu0 %v608, 96
        %v1523 = vpop.permute.xlu0 %1522
        %1524 = vrot.lane.b32.xlu0 %v613, 96
        %v1525 = vpop.permute.xlu0 %1524
        %1526 = vrot.lane.b32.xlu0 %v618, 96
        %v1527 = vpop.permute.xlu0 %1526
        %1544 = vmatprep.subr.mxu0 0.0
        %1545 = vmatpush1.msra.mxu0 %v1497
        %1546 = vmatprep.subr.mxu0 0.0
        %1547 = vmatpush1.msra.mxu0 %v1499
        %1548 = vmatprep.subr.mxu0 0.0
        %1549 = vmatpush1.msra.mxu0 %v1501
        %1550 = vmatprep.subr.mxu0 0.0
        %1551 = vmatpush1.msra.mxu0 %v1503
        %1552 = vmatprep.subr.mxu0 0.0
        %1553 = vmatpush1.msra.mxu0 %v1505
        %1554 = vmatprep.subr.mxu0 0.0
        %1555 = vmatpush1.msra.mxu0 %v1507
        %1556 = vmatprep.subr.mxu0 0.0
        %1557 = vmatpush1.msra.mxu0 %v1509
        %1558 = vmatprep.subr.mxu0 0.0
        %1559 = vmatpush1.msra.mxu0 %v1511
        %1560 = vmatprep.subr.mxu0 0.0
        %1561 = vmatpush1.msra.mxu0 %v1513
        %1562 = vmatprep.subr.mxu0 0.0
        %1563 = vmatpush1.msra.mxu0 %v1515
        %1564 = vmatprep.subr.mxu0 0.0
        %1565 = vmatpush1.msra.mxu0 %v1517
        %1566 = vmatprep.subr.mxu0 0.0
        %1567 = vmatpush1.msra.mxu0 %v1519
        %1568 = vmatprep.subr.mxu0 0.0
        %1569 = vmatpush1.msra.mxu0 %v1521
        %1570 = vmatprep.subr.mxu0 0.0
        %1571 = vmatpush1.msra.mxu0 %v1523
        %1572 = vmatprep.subr.mxu0 0.0
        %1573 = vmatpush1.msra.mxu0 %v1525
        %1574 = vmatprep.subr.mxu0 0.0
        %1575 = vmatpush1.msra.mxu0 %v1527
        %1576 = vmatprep.subr.mxu0 0.0
        %1577 = vmatpush1.msra.mxu0 0.0
        %1578 = vmatprep.subr.mxu0 0.0
        %1579 = vmatpush1.msra.mxu0 0.0
        %1580 = vmatprep.subr.mxu0 0.0
        %1581 = vmatpush1.msra.mxu0 0.0
        %1582 = vmatprep.subr.mxu0 0.0
        %1583 = vmatpush1.msra.mxu0 0.0
        %1584 = vmatprep.subr.mxu0 0.0
        %1585 = vmatpush1.msra.mxu0 0.0
        %1586 = vmatprep.subr.mxu0 0.0
        %1587 = vmatpush1.msra.mxu0 0.0
        %1588 = vmatprep.subr.mxu0 0.0
        %1589 = vmatpush1.msra.mxu0 0.0
        %1590 = vmatprep.subr.mxu0 0.0
        %1591 = vmatpush1.msra.mxu0 0.0
        %1592 = vmatprep.subr.mxu0 0.0
        %1593 = vmatpush1.msra.mxu0 0.0
        %1594 = vmatprep.subr.mxu0 0.0
        %1595 = vmatpush1.msra.mxu0 0.0
        %1596 = vmatprep.subr.mxu0 0.0
        %1597 = vmatpush1.msra.mxu0 0.0
        %1598 = vmatprep.subr.mxu0 0.0
        %1599 = vmatpush1.msra.mxu0 0.0
        %1600 = vmatprep.subr.mxu0 0.0
        %1601 = vmatpush1.msra.mxu0 0.0
        %1602 = vmatprep.subr.mxu0 0.0
        %1603 = vmatpush1.msra.mxu0 0.0
        %1604 = vmatprep.subr.mxu0 0.0
        %1605 = vmatpush1.msra.mxu0 0.0
        %1606 = vmatprep.subr.mxu0 0.0
        %1607 = vmatpush1.msra.mxu0 0.0
        %1608 = vmatprep.mubr.f32.mxu0 0.0
        %1609 = vmatmul.mubr.f32.gmra.mrb[0].mxu0 %v1472
        %v1610 = vpop.f32.mrb[0].mxu0
        %v1611 = vadd.f32 0.0, %v1610
        %v1612 = vpop.f32.mrb[0].mxu0
        %1613 = vmatprep.mubr.f32.mxu0 0.0
        %1614 = vmatmul.mubr.f32.gmra.mrb[0].mxu0 %v1473
        %v1615 = vpop.f32.mrb[0].mxu0
        %v1616 = vadd.f32 0.0, %v1615
        %v1617 = vpop.f32.mrb[0].mxu0
        %1618 = vmatprep.mubr.f32.mxu0 0.0
        %1619 = vmatmul.mubr.f32.gmra.mrb[0].mxu0 %v1474
        %v1620 = vpop.f32.mrb[0].mxu0
        %v1621 = vadd.f32 0.0, %v1620
        %v1622 = vpop.f32.mrb[0].mxu0
        %1623 = vmatprep.mubr.f32.mxu0 0.0
        %1624 = vmatmul.mubr.f32.gmra.mrb[0].mxu0 %v1475
        %v1625 = vpop.f32.mrb[0].mxu0
        %v1626 = vadd.f32 0.0, %v1625
        %v1627 = vpop.f32.mrb[0].mxu0
        %1628 = vmatprep.mubr.f32.mxu0 0.0
        %1629 = vmatmul.mubr.f32.gmra.mrb[0].mxu0 %v1476
        %v1630 = vpop.f32.mrb[0].mxu0
        %v1631 = vadd.f32 0.0, %v1630
        %v1632 = vpop.f32.mrb[0].mxu0
        %1633 = vmatprep.mubr.f32.mxu0 0.0
        %1634 = vmatmul.mubr.f32.gmra.mrb[0].mxu0 %v1477
        %v1635 = vpop.f32.mrb[0].mxu0
        %v1636 = vadd.f32 0.0, %v1635
        %v1637 = vpop.f32.mrb[0].mxu0
        %1638 = vmatprep.mubr.f32.mxu0 0.0
        %1639 = vmatmul.mubr.f32.gmra.mrb[0].mxu0 %v1478
        %v1640 = vpop.f32.mrb[0].mxu0
        %v1641 = vadd.f32 0.0, %v1640
        %v1642 = vpop.f32.mrb[0].mxu0
        %1643 = vmatprep.mubr.f32.mxu0 0.0
        %1644 = vmatmul.mubr.f32.gmra.mrb[0].mxu0 %v1479
        %v1645 = vpop.f32.mrb[0].mxu0
        %v1646 = vadd.f32 0.0, %v1645
        %v1647 = vpop.f32.mrb[0].mxu0
        %1648 = vdwg.mxu0
        %vm1649 = vcmp.gt.f32.partialorder %v1611, 0.0
        %vm1650 = vcmp.gt.f32.partialorder %v1616, 0.0
        %vm1651 = vcmp.gt.f32.partialorder %v1621, 0.0
        %vm1652 = vcmp.gt.f32.partialorder %v1626, 0.0
        %vm1653 = vcmp.gt.f32.partialorder %v1631, 0.0
        %vm1654 = vcmp.gt.f32.partialorder %v1636, 0.0
        %vm1655 = vcmp.gt.f32.partialorder %v1641, 0.0
        %vm1656 = vcmp.gt.f32.partialorder %v1646, 0.0
        %v1657 = vmin.f32 %v1611, 0.0
        %v1658 = vmin.f32 %v1616, 0.0
        %v1659 = vmin.f32 %v1621, 0.0
        %v1660 = vmin.f32 %v1626, 0.0
        %v1661 = vmin.f32 %v1631, 0.0
        %v1662 = vmin.f32 %v1636, 0.0
        %v1663 = vmin.f32 %v1641, 0.0
        %v1664 = vmin.f32 %v1646, 0.0
        %v1665 = vmul.f32 %v1657, 1.442695
        %v1666 = vpow.pop %v1665
        %v1667 = vmul.f32 %v1658, 1.442695
        %v1668 = vpow.pop %v1667
        %v1669 = vmul.f32 %v1659, 1.442695
        %v1670 = vpow.pop %v1669
        %v1671 = vmul.f32 %v1660, 1.442695
        %v1672 = vpow.pop %v1671
        %v1673 = vmul.f32 %v1661, 1.442695
        %v1674 = vpow.pop %v1673
        %v1675 = vmul.f32 %v1662, 1.442695
        %v1676 = vpow.pop %v1675
        %v1677 = vmul.f32 %v1663, 1.442695
        %v1678 = vpow.pop %v1677
        %v1679 = vmul.f32 %v1664, 1.442695
        %v1680 = vpow.pop %v1679
        %v1681 = vsub.f32 %v1666, 1.0
        %v1682 = vsub.f32 %v1668, 1.0
        %v1683 = vsub.f32 %v1670, 1.0
        %v1684 = vsub.f32 %v1672, 1.0
        %v1685 = vsub.f32 %v1674, 1.0
        %v1686 = vsub.f32 %v1676, 1.0
        %v1687 = vsub.f32 %v1678, 1.0
        %v1688 = vsub.f32 %v1680, 1.0
        %v1689 = vsel %vm1649, %v1611, %v1681
        %v1690 = vsel %vm1650, %v1616, %v1682
        %v1691 = vsel %vm1651, %v1621, %v1683
        %v1692 = vsel %vm1652, %v1626, %v1684
        %v1693 = vsel %vm1653, %v1631, %v1685
        %v1694 = vsel %vm1654, %v1636, %v1686
        %v1695 = vsel %vm1655, %v1641, %v1687
        %v1696 = vsel %vm1656, %v1646, %v1688
        %1697 = vset.pattern.permute.xlu0 2
        %1698 = vperm.xlu0 %1697, %v688
        %v1699 = vpop.permute.xlu0 %1698
        %1701 = vset.pattern.permute.xlu0 2
        %1702 = vperm.xlu0 %1701, %v693
        %v1703 = vpop.permute.xlu0 %1702
        %1705 = vset.pattern.permute.xlu0 2
        %1706 = vperm.xlu0 %1705, %v698
        %v1707 = vpop.permute.xlu0 %1706
        %1709 = vset.pattern.permute.xlu0 2
        %1710 = vperm.xlu0 %1709, %v703
        %v1711 = vpop.permute.xlu0 %1710
        %1713 = vset.pattern.permute.xlu0 2
        %1714 = vperm.xlu0 %1713, %v708
        %v1715 = vpop.permute.xlu0 %1714
        %1717 = vset.pattern.permute.xlu0 2
        %1718 = vperm.xlu0 %1717, %v713
        %v1719 = vpop.permute.xlu0 %1718
        %1721 = vset.pattern.permute.xlu0 2
        %1722 = vperm.xlu0 %1721, %v718
        %v1723 = vpop.permute.xlu0 %1722
        %1725 = vset.pattern.permute.xlu0 2
        %1726 = vperm.xlu0 %1725, %v723
        %v1727 = vpop.permute.xlu0 %1726
        %v1729 = vlaneseq
        %v1730 = vshrl.u32 %v1729, 7
        %v1731 = vsub.s32 2, %v1730
        %v1732 = vrot.slane %v951, %v1731
        %v1733 = vadd.f32 %v1699, %v1732
        %v1734 = vadd.f32 %v1703, %v1732
        %v1735 = vadd.f32 %v1707, %v1732
        %v1736 = vadd.f32 %v1711, %v1732
        %v1737 = vadd.f32 %v1715, %v1732
        %v1738 = vadd.f32 %v1719, %v1732
        %v1739 = vadd.f32 %v1723, %v1732
        %v1740 = vadd.f32 %v1727, %v1732
        %vm1741 = vcmp.gt.f32.partialorder %v1733, 0.0
        %vm1742 = vcmp.gt.f32.partialorder %v1734, 0.0
        %vm1743 = vcmp.gt.f32.partialorder %v1735, 0.0
        %vm1744 = vcmp.gt.f32.partialorder %v1736, 0.0
        %vm1745 = vcmp.gt.f32.partialorder %v1737, 0.0
        %vm1746 = vcmp.gt.f32.partialorder %v1738, 0.0
        %vm1747 = vcmp.gt.f32.partialorder %v1739, 0.0
        %vm1748 = vcmp.gt.f32.partialorder %v1740, 0.0
        %v1749 = vmul.f32 %v1733, 0.2
        %v1750 = vmul.f32 %v1734, 0.2
        %v1751 = vmul.f32 %v1735, 0.2
        %v1752 = vmul.f32 %v1736, 0.2
        %v1753 = vmul.f32 %v1737, 0.2
        %v1754 = vmul.f32 %v1738, 0.2
        %v1755 = vmul.f32 %v1739, 0.2
        %v1756 = vmul.f32 %v1740, 0.2
        %v1757 = vsel %vm1741, %v1733, %v1749
        %v1758 = vsel %vm1742, %v1734, %v1750
        %v1759 = vsel %vm1743, %v1735, %v1751
        %v1760 = vsel %vm1744, %v1736, %v1752
        %v1761 = vsel %vm1745, %v1737, %v1753
        %v1762 = vsel %vm1746, %v1738, %v1754
        %v1763 = vsel %vm1747, %v1739, %v1755
        %v1764 = vsel %vm1748, %v1740, %v1756
        %v1765 = vsel %vm1043, %v1757, 9e-15
        %v1766 = vsel %vm1044, %v1758, 9e-15
        %v1767 = vsel %vm1045, %v1759, 9e-15
        %v1768 = vsel %vm1046, %v1760, 9e-15
        %v1769 = vsel %vm1047, %v1761, 9e-15
        %v1770 = vsel %vm1048, %v1762, 9e-15
        %v1771 = vsel %vm1049, %v1763, 9e-15
        %v1772 = vsel %vm1050, %v1764, 9e-15
        %1773 = vmax.xlane.f32.xlu0 %v1765
        %v1774 = vpop.xlane.xlu0 %1773
        %1775 = vmax.xlane.f32.xlu0 %v1766
        %v1776 = vpop.xlane.xlu0 %1775
        %1777 = vmax.xlane.f32.xlu0 %v1767
        %v1778 = vpop.xlane.xlu0 %1777
        %1779 = vmax.xlane.f32.xlu0 %v1768
        %v1780 = vpop.xlane.xlu0 %1779
        %1781 = vmax.xlane.f32.xlu0 %v1769
        %v1782 = vpop.xlane.xlu0 %1781
        %1783 = vmax.xlane.f32.xlu0 %v1770
        %v1784 = vpop.xlane.xlu0 %1783
        %1785 = vmax.xlane.f32.xlu0 %v1771
        %v1786 = vpop.xlane.xlu0 %1785
        %1787 = vmax.xlane.f32.xlu0 %v1772
        %v1788 = vpop.xlane.xlu0 %1787
        %v1789 = vsub.f32 %v1765, %v1774
        %v1790 = vsub.f32 %v1766, %v1776
        %v1791 = vsub.f32 %v1767, %v1778
        %v1792 = vsub.f32 %v1768, %v1780
        %v1793 = vsub.f32 %v1769, %v1782
        %v1794 = vsub.f32 %v1770, %v1784
        %v1795 = vsub.f32 %v1771, %v1786
        %v1796 = vsub.f32 %v1772, %v1788
        %v1797 = vmul.f32 %v1789, 1.442695
        %v1798 = vpow.pop %v1797
        %v1799 = vmul.f32 %v1790, 1.442695
        %v1800 = vpow.pop %v1799
        %v1801 = vmul.f32 %v1791, 1.442695
        %v1802 = vpow.pop %v1801
        %v1803 = vmul.f32 %v1792, 1.442695
        %v1804 = vpow.pop %v1803
        %v1805 = vmul.f32 %v1793, 1.442695
        %v1806 = vpow.pop %v1805
        %v1807 = vmul.f32 %v1794, 1.442695
        %v1808 = vpow.pop %v1807
        %v1809 = vmul.f32 %v1795, 1.442695
        %v1810 = vpow.pop %v1809
        %v1811 = vmul.f32 %v1796, 1.442695
        %v1812 = vpow.pop %v1811
        %1813 = vadd.xlane.f32.xlu0 %v1798
        %v1814 = vpop.xlane.xlu0 %1813
        %1815 = vadd.xlane.f32.xlu0 %v1800
        %v1816 = vpop.xlane.xlu0 %1815
        %1817 = vadd.xlane.f32.xlu0 %v1802
        %v1818 = vpop.xlane.xlu0 %1817
        %1819 = vadd.xlane.f32.xlu0 %v1804
        %v1820 = vpop.xlane.xlu0 %1819
        %1821 = vadd.xlane.f32.xlu0 %v1806
        %v1822 = vpop.xlane.xlu0 %1821
        %1823 = vadd.xlane.f32.xlu0 %v1808
        %v1824 = vpop.xlane.xlu0 %1823
        %1825 = vadd.xlane.f32.xlu0 %v1810
        %v1826 = vpop.xlane.xlu0 %1825
        %1827 = vadd.xlane.f32.xlu0 %v1812
        %v1828 = vpop.xlane.xlu0 %1827
        %v1829 = vrcp.pop %v1814
        %v1830 = vrcp.pop %v1816
        %v1831 = vrcp.pop %v1818
        %v1832 = vrcp.pop %v1820
        %v1833 = vrcp.pop %v1822
        %v1834 = vrcp.pop %v1824
        %v1835 = vrcp.pop %v1826
        %v1836 = vrcp.pop %v1828
        %v1837 = vmul.f32 %v1814, %v1829
        %v1838 = vmul.f32 %v1816, %v1830
        %v1839 = vmul.f32 %v1818, %v1831
        %v1840 = vmul.f32 %v1820, %v1832
        %v1841 = vmul.f32 %v1822, %v1833
        %v1842 = vmul.f32 %v1824, %v1834
        %v1843 = vmul.f32 %v1826, %v1835
        %v1844 = vmul.f32 %v1828, %v1836
        %v1845 = vsub.f32 2.0, %v1837
        %v1846 = vsub.f32 2.0, %v1838
        %v1847 = vsub.f32 2.0, %v1839
        %v1848 = vsub.f32 2.0, %v1840
        %v1849 = vsub.f32 2.0, %v1841
        %v1850 = vsub.f32 2.0, %v1842
        %v1851 = vsub.f32 2.0, %v1843
        %v1852 = vsub.f32 2.0, %v1844
        %v1853 = vmul.f32 %v1829, %v1845
        %v1854 = vmul.f32 %v1830, %v1846
        %v1855 = vmul.f32 %v1831, %v1847
        %v1856 = vmul.f32 %v1832, %v1848
        %v1857 = vmul.f32 %v1833, %v1849
        %v1858 = vmul.f32 %v1834, %v1850
        %v1859 = vmul.f32 %v1835, %v1851
        %v1860 = vmul.f32 %v1836, %v1852
        %v1861 = vmul.f32 %v1798, %v1853
        %v1862 = vmul.f32 %v1800, %v1854
        %v1863 = vmul.f32 %v1802, %v1855
        %v1864 = vmul.f32 %v1804, %v1856
        %v1865 = vmul.f32 %v1806, %v1857
        %v1866 = vmul.f32 %v1808, %v1858
        %v1867 = vmul.f32 %v1810, %v1859
        %v1868 = vmul.f32 %v1812, %v1860
        %1869 = vrot.lane.b32.xlu0 %v543, 64
        %v1870 = vpop.permute.xlu0 %1869
        %1871 = vrot.lane.b32.xlu0 %v548, 64
        %v1872 = vpop.permute.xlu0 %1871
        %1873 = vrot.lane.b32.xlu0 %v553, 64
        %v1874 = vpop.permute.xlu0 %1873
        %1875 = vrot.lane.b32.xlu0 %v558, 64
        %v1876 = vpop.permute.xlu0 %1875
        %1877 = vrot.lane.b32.xlu0 %v563, 64
        %v1878 = vpop.permute.xlu0 %1877
        %1879 = vrot.lane.b32.xlu0 %v568, 64
        %v1880 = vpop.permute.xlu0 %1879
        %1881 = vrot.lane.b32.xlu0 %v573, 64
        %v1882 = vpop.permute.xlu0 %1881
        %1883 = vrot.lane.b32.xlu0 %v578, 64
        %v1884 = vpop.permute.xlu0 %1883
        %1885 = vrot.lane.b32.xlu0 %v583, 64
        %v1886 = vpop.permute.xlu0 %1885
        %1887 = vrot.lane.b32.xlu0 %v588, 64
        %v1888 = vpop.permute.xlu0 %1887
        %1889 = vrot.lane.b32.xlu0 %v593, 64
        %v1890 = vpop.permute.xlu0 %1889
        %1891 = vrot.lane.b32.xlu0 %v598, 64
        %v1892 = vpop.permute.xlu0 %1891
        %1893 = vrot.lane.b32.xlu0 %v603, 64
        %v1894 = vpop.permute.xlu0 %1893
        %1895 = vrot.lane.b32.xlu0 %v608, 64
        %v1896 = vpop.permute.xlu0 %1895
        %1897 = vrot.lane.b32.xlu0 %v613, 64
        %v1898 = vpop.permute.xlu0 %1897
        %1899 = vrot.lane.b32.xlu0 %v618, 64
        %v1900 = vpop.permute.xlu0 %1899
        %1917 = vmatprep.subr.mxu0 0.0
        %1918 = vmatpush1.msra.mxu0 %v1870
        %1919 = vmatprep.subr.mxu0 0.0
        %1920 = vmatpush1.msra.mxu0 %v1872
        %1921 = vmatprep.subr.mxu0 0.0
        %1922 = vmatpush1.msra.mxu0 %v1874
        %1923 = vmatprep.subr.mxu0 0.0
        %1924 = vmatpush1.msra.mxu0 %v1876
        %1925 = vmatprep.subr.mxu0 0.0
        %1926 = vmatpush1.msra.mxu0 %v1878
        %1927 = vmatprep.subr.mxu0 0.0
        %1928 = vmatpush1.msra.mxu0 %v1880
        %1929 = vmatprep.subr.mxu0 0.0
        %1930 = vmatpush1.msra.mxu0 %v1882
        %1931 = vmatprep.subr.mxu0 0.0
        %1932 = vmatpush1.msra.mxu0 %v1884
        %1933 = vmatprep.subr.mxu0 0.0
        %1934 = vmatpush1.msra.mxu0 %v1886
        %1935 = vmatprep.subr.mxu0 0.0
        %1936 = vmatpush1.msra.mxu0 %v1888
        %1937 = vmatprep.subr.mxu0 0.0
        %1938 = vmatpush1.msra.mxu0 %v1890
        %1939 = vmatprep.subr.mxu0 0.0
        %1940 = vmatpush1.msra.mxu0 %v1892
        %1941 = vmatprep.subr.mxu0 0.0
        %1942 = vmatpush1.msra.mxu0 %v1894
        %1943 = vmatprep.subr.mxu0 0.0
        %1944 = vmatpush1.msra.mxu0 %v1896
        %1945 = vmatprep.subr.mxu0 0.0
        %1946 = vmatpush1.msra.mxu0 %v1898
        %1947 = vmatprep.subr.mxu0 0.0
        %1948 = vmatpush1.msra.mxu0 %v1900
        %1949 = vmatprep.subr.mxu0 0.0
        %1950 = vmatpush1.msra.mxu0 0.0
        %1951 = vmatprep.subr.mxu0 0.0
        %1952 = vmatpush1.msra.mxu0 0.0
        %1953 = vmatprep.subr.mxu0 0.0
        %1954 = vmatpush1.msra.mxu0 0.0
        %1955 = vmatprep.subr.mxu0 0.0
        %1956 = vmatpush1.msra.mxu0 0.0
        %1957 = vmatprep.subr.mxu0 0.0
        %1958 = vmatpush1.msra.mxu0 0.0
        %1959 = vmatprep.subr.mxu0 0.0
        %1960 = vmatpush1.msra.mxu0 0.0
        %1961 = vmatprep.subr.mxu0 0.0
        %1962 = vmatpush1.msra.mxu0 0.0
        %1963 = vmatprep.subr.mxu0 0.0
        %1964 = vmatpush1.msra.mxu0 0.0
        %1965 = vmatprep.subr.mxu0 0.0
        %1966 = vmatpush1.msra.mxu0 0.0
        %1967 = vmatprep.subr.mxu0 0.0
        %1968 = vmatpush1.msra.mxu0 0.0
        %1969 = vmatprep.subr.mxu0 0.0
        %1970 = vmatpush1.msra.mxu0 0.0
        %1971 = vmatprep.subr.mxu0 0.0
        %1972 = vmatpush1.msra.mxu0 0.0
        %1973 = vmatprep.subr.mxu0 0.0
        %1974 = vmatpush1.msra.mxu0 0.0
        %1975 = vmatprep.subr.mxu0 0.0
        %1976 = vmatpush1.msra.mxu0 0.0
        %1977 = vmatprep.subr.mxu0 0.0
        %1978 = vmatpush1.msra.mxu0 0.0
        %1979 = vmatprep.subr.mxu0 0.0
        %1980 = vmatpush1.msra.mxu0 0.0
        %1981 = vmatprep.mubr.f32.mxu0 0.0
        %1982 = vmatmul.mubr.f32.gmra.mrb[0].mxu0 %v1861
        %v1983 = vpop.f32.mrb[0].mxu0
        %v1984 = vadd.f32 0.0, %v1983
        %v1985 = vpop.f32.mrb[0].mxu0
        %1986 = vmatprep.mubr.f32.mxu0 0.0
        %1987 = vmatmul.mubr.f32.gmra.mrb[0].mxu0 %v1862
        %v1988 = vpop.f32.mrb[0].mxu0
        %v1989 = vadd.f32 0.0, %v1988
        %v1990 = vpop.f32.mrb[0].mxu0
        %1991 = vmatprep.mubr.f32.mxu0 0.0
        %1992 = vmatmul.mubr.f32.gmra.mrb[0].mxu0 %v1863
        %v1993 = vpop.f32.mrb[0].mxu0
        %v1994 = vadd.f32 0.0, %v1993
        %v1995 = vpop.f32.mrb[0].mxu0
        %1996 = vmatprep.mubr.f32.mxu0 0.0
        %1997 = vmatmul.mubr.f32.gmra.mrb[0].mxu0 %v1864
        %v1998 = vpop.f32.mrb[0].mxu0
        %v1999 = vadd.f32 0.0, %v1998
        %v2000 = vpop.f32.mrb[0].mxu0
        %2001 = vmatprep.mubr.f32.mxu0 0.0
        %2002 = vmatmul.mubr.f32.gmra.mrb[0].mxu0 %v1865
        %v2003 = vpop.f32.mrb[0].mxu0
        %v2004 = vadd.f32 0.0, %v2003
        %v2005 = vpop.f32.mrb[0].mxu0
        %2006 = vmatprep.mubr.f32.mxu0 0.0
        %2007 = vmatmul.mubr.f32.gmra.mrb[0].mxu0 %v1866
        %v2008 = vpop.f32.mrb[0].mxu0
        %v2009 = vadd.f32 0.0, %v2008
        %v2010 = vpop.f32.mrb[0].mxu0
        %2011 = vmatprep.mubr.f32.mxu0 0.0
        %2012 = vmatmul.mubr.f32.gmra.mrb[0].mxu0 %v1867
        %v2013 = vpop.f32.mrb[0].mxu0
        %v2014 = vadd.f32 0.0, %v2013
        %v2015 = vpop.f32.mrb[0].mxu0
        %2016 = vmatprep.mubr.f32.mxu0 0.0
        %2017 = vmatmul.mubr.f32.gmra.mrb[0].mxu0 %v1868
        %v2018 = vpop.f32.mrb[0].mxu0
        %v2019 = vadd.f32 0.0, %v2018
        %v2020 = vpop.f32.mrb[0].mxu0
        %2021 = vdwg.mxu0
        %vm2022 = vcmp.gt.f32.partialorder %v1984, 0.0
        %vm2023 = vcmp.gt.f32.partialorder %v1989, 0.0
        %vm2024 = vcmp.gt.f32.partialorder %v1994, 0.0
        %vm2025 = vcmp.gt.f32.partialorder %v1999, 0.0
        %vm2026 = vcmp.gt.f32.partialorder %v2004, 0.0
        %vm2027 = vcmp.gt.f32.partialorder %v2009, 0.0
        %vm2028 = vcmp.gt.f32.partialorder %v2014, 0.0
        %vm2029 = vcmp.gt.f32.partialorder %v2019, 0.0
        %v2030 = vmin.f32 %v1984, 0.0
        %v2031 = vmin.f32 %v1989, 0.0
        %v2032 = vmin.f32 %v1994, 0.0
        %v2033 = vmin.f32 %v1999, 0.0
        %v2034 = vmin.f32 %v2004, 0.0
        %v2035 = vmin.f32 %v2009, 0.0
        %v2036 = vmin.f32 %v2014, 0.0
        %v2037 = vmin.f32 %v2019, 0.0
        %v2038 = vmul.f32 %v2030, 1.442695
        %v2039 = vpow.pop %v2038
        %v2040 = vmul.f32 %v2031, 1.442695
        %v2041 = vpow.pop %v2040
        %v2042 = vmul.f32 %v2032, 1.442695
        %v2043 = vpow.pop %v2042
        %v2044 = vmul.f32 %v2033, 1.442695
        %v2045 = vpow.pop %v2044
        %v2046 = vmul.f32 %v2034, 1.442695
        %v2047 = vpow.pop %v2046
        %v2048 = vmul.f32 %v2035, 1.442695
        %v2049 = vpow.pop %v2048
        %v2050 = vmul.f32 %v2036, 1.442695
        %v2051 = vpow.pop %v2050
        %v2052 = vmul.f32 %v2037, 1.442695
        %v2053 = vpow.pop %v2052
        %v2054 = vsub.f32 %v2039, 1.0
        %v2055 = vsub.f32 %v2041, 1.0
        %v2056 = vsub.f32 %v2043, 1.0
        %v2057 = vsub.f32 %v2045, 1.0
        %v2058 = vsub.f32 %v2047, 1.0
        %v2059 = vsub.f32 %v2049, 1.0
        %v2060 = vsub.f32 %v2051, 1.0
        %v2061 = vsub.f32 %v2053, 1.0
        %v2062 = vsel %vm2022, %v1984, %v2054
        %v2063 = vsel %vm2023, %v1989, %v2055
        %v2064 = vsel %vm2024, %v1994, %v2056
        %v2065 = vsel %vm2025, %v1999, %v2057
        %v2066 = vsel %vm2026, %v2004, %v2058
        %v2067 = vsel %vm2027, %v2009, %v2059
        %v2068 = vsel %vm2028, %v2014, %v2060
        %v2069 = vsel %vm2029, %v2019, %v2061
        %2070 = vset.pattern.permute.xlu0 3
        %2071 = vperm.xlu0 %2070, %v688
        %v2072 = vpop.permute.xlu0 %2071
        %2074 = vset.pattern.permute.xlu0 3
        %2075 = vperm.xlu0 %2074, %v693
        %v2076 = vpop.permute.xlu0 %2075
        %2078 = vset.pattern.permute.xlu0 3
        %2079 = vperm.xlu0 %2078, %v698
        %v2080 = vpop.permute.xlu0 %2079
        %2082 = vset.pattern.permute.xlu0 3
        %2083 = vperm.xlu0 %2082, %v703
        %v2084 = vpop.permute.xlu0 %2083
        %2086 = vset.pattern.permute.xlu0 3
        %2087 = vperm.xlu0 %2086, %v708
        %v2088 = vpop.permute.xlu0 %2087
        %2090 = vset.pattern.permute.xlu0 3
        %2091 = vperm.xlu0 %2090, %v713
        %v2092 = vpop.permute.xlu0 %2091
        %2094 = vset.pattern.permute.xlu0 3
        %2095 = vperm.xlu0 %2094, %v718
        %v2096 = vpop.permute.xlu0 %2095
        %2098 = vset.pattern.permute.xlu0 3
        %2099 = vperm.xlu0 %2098, %v723
        %v2100 = vpop.permute.xlu0 %2099
        %v2102 = vlaneseq
        %v2103 = vshrl.u32 %v2102, 7
        %v2104 = vsub.s32 3, %v2103
        %v2105 = vrot.slane %v951, %v2104
        %v2106 = vadd.f32 %v2072, %v2105
        %v2107 = vadd.f32 %v2076, %v2105
        %v2108 = vadd.f32 %v2080, %v2105
        %v2109 = vadd.f32 %v2084, %v2105
        %v2110 = vadd.f32 %v2088, %v2105
        %v2111 = vadd.f32 %v2092, %v2105
        %v2112 = vadd.f32 %v2096, %v2105
        %v2113 = vadd.f32 %v2100, %v2105
        %vm2114 = vcmp.gt.f32.partialorder %v2106, 0.0
        %vm2115 = vcmp.gt.f32.partialorder %v2107, 0.0
        %vm2116 = vcmp.gt.f32.partialorder %v2108, 0.0
        %vm2117 = vcmp.gt.f32.partialorder %v2109, 0.0
        %vm2118 = vcmp.gt.f32.partialorder %v2110, 0.0
        %vm2119 = vcmp.gt.f32.partialorder %v2111, 0.0
        %vm2120 = vcmp.gt.f32.partialorder %v2112, 0.0
        %vm2121 = vcmp.gt.f32.partialorder %v2113, 0.0
        %v2122 = vmul.f32 %v2106, 0.2
        %v2123 = vmul.f32 %v2107, 0.2
        %v2124 = vmul.f32 %v2108, 0.2
        %v2125 = vmul.f32 %v2109, 0.2
        %v2126 = vmul.f32 %v2110, 0.2
        %v2127 = vmul.f32 %v2111, 0.2
        %v2128 = vmul.f32 %v2112, 0.2
        %v2129 = vmul.f32 %v2113, 0.2
        %v2130 = vsel %vm2114, %v2106, %v2122
        %v2131 = vsel %vm2115, %v2107, %v2123
        %v2132 = vsel %vm2116, %v2108, %v2124
        %v2133 = vsel %vm2117, %v2109, %v2125
        %v2134 = vsel %vm2118, %v2110, %v2126
        %v2135 = vsel %vm2119, %v2111, %v2127
        %v2136 = vsel %vm2120, %v2112, %v2128
        %v2137 = vsel %vm2121, %v2113, %v2129
        %v2138 = vsel %vm1043, %v2130, 9e-15
        %v2139 = vsel %vm1044, %v2131, 9e-15
        %v2140 = vsel %vm1045, %v2132, 9e-15
        %v2141 = vsel %vm1046, %v2133, 9e-15
        %v2142 = vsel %vm1047, %v2134, 9e-15
        %v2143 = vsel %vm1048, %v2135, 9e-15
        %v2144 = vsel %vm1049, %v2136, 9e-15
        %v2145 = vsel %vm1050, %v2137, 9e-15
        %2146 = vmax.xlane.f32.xlu0 %v2138
        %v2147 = vpop.xlane.xlu0 %2146
        %2148 = vmax.xlane.f32.xlu0 %v2139
        %v2149 = vpop.xlane.xlu0 %2148
        %2150 = vmax.xlane.f32.xlu0 %v2140
        %v2151 = vpop.xlane.xlu0 %2150
        %2152 = vmax.xlane.f32.xlu0 %v2141
        %v2153 = vpop.xlane.xlu0 %2152
        %2154 = vmax.xlane.f32.xlu0 %v2142
        %v2155 = vpop.xlane.xlu0 %2154
        %2156 = vmax.xlane.f32.xlu0 %v2143
        %v2157 = vpop.xlane.xlu0 %2156
        %2158 = vmax.xlane.f32.xlu0 %v2144
        %v2159 = vpop.xlane.xlu0 %2158
        %2160 = vmax.xlane.f32.xlu0 %v2145
        %v2161 = vpop.xlane.xlu0 %2160
        %v2162 = vsub.f32 %v2138, %v2147
        %v2163 = vsub.f32 %v2139, %v2149
        %v2164 = vsub.f32 %v2140, %v2151
        %v2165 = vsub.f32 %v2141, %v2153
        %v2166 = vsub.f32 %v2142, %v2155
        %v2167 = vsub.f32 %v2143, %v2157
        %v2168 = vsub.f32 %v2144, %v2159
        %v2169 = vsub.f32 %v2145, %v2161
        %v2170 = vmul.f32 %v2162, 1.442695
        %v2171 = vpow.pop %v2170
        %v2172 = vmul.f32 %v2163, 1.442695
        %v2173 = vpow.pop %v2172
        %v2174 = vmul.f32 %v2164, 1.442695
        %v2175 = vpow.pop %v2174
        %v2176 = vmul.f32 %v2165, 1.442695
        %v2177 = vpow.pop %v2176
        %v2178 = vmul.f32 %v2166, 1.442695
        %v2179 = vpow.pop %v2178
        %v2180 = vmul.f32 %v2167, 1.442695
        %v2181 = vpow.pop %v2180
        %v2182 = vmul.f32 %v2168, 1.442695
        %v2183 = vpow.pop %v2182
        %v2184 = vmul.f32 %v2169, 1.442695
        %v2185 = vpow.pop %v2184
        %2186 = vadd.xlane.f32.xlu0 %v2171
        %v2187 = vpop.xlane.xlu0 %2186
        %2188 = vadd.xlane.f32.xlu0 %v2173
        %v2189 = vpop.xlane.xlu0 %2188
        %2190 = vadd.xlane.f32.xlu0 %v2175
        %v2191 = vpop.xlane.xlu0 %2190
        %2192 = vadd.xlane.f32.xlu0 %v2177
        %v2193 = vpop.xlane.xlu0 %2192
        %2194 = vadd.xlane.f32.xlu0 %v2179
        %v2195 = vpop.xlane.xlu0 %2194
        %2196 = vadd.xlane.f32.xlu0 %v2181
        %v2197 = vpop.xlane.xlu0 %2196
        %2198 = vadd.xlane.f32.xlu0 %v2183
        %v2199 = vpop.xlane.xlu0 %2198
        %2200 = vadd.xlane.f32.xlu0 %v2185
        %v2201 = vpop.xlane.xlu0 %2200
        %v2202 = vrcp.pop %v2187
        %v2203 = vrcp.pop %v2189
        %v2204 = vrcp.pop %v2191
        %v2205 = vrcp.pop %v2193
        %v2206 = vrcp.pop %v2195
        %v2207 = vrcp.pop %v2197
        %v2208 = vrcp.pop %v2199
        %v2209 = vrcp.pop %v2201
        %v2210 = vmul.f32 %v2187, %v2202
        %v2211 = vmul.f32 %v2189, %v2203
        %v2212 = vmul.f32 %v2191, %v2204
        %v2213 = vmul.f32 %v2193, %v2205
        %v2214 = vmul.f32 %v2195, %v2206
        %v2215 = vmul.f32 %v2197, %v2207
        %v2216 = vmul.f32 %v2199, %v2208
        %v2217 = vmul.f32 %v2201, %v2209
        %v2218 = vsub.f32 2.0, %v2210
        %v2219 = vsub.f32 2.0, %v2211
        %v2220 = vsub.f32 2.0, %v2212
        %v2221 = vsub.f32 2.0, %v2213
        %v2222 = vsub.f32 2.0, %v2214
        %v2223 = vsub.f32 2.0, %v2215
        %v2224 = vsub.f32 2.0, %v2216
        %v2225 = vsub.f32 2.0, %v2217
        %v2226 = vmul.f32 %v2202, %v2218
        %v2227 = vmul.f32 %v2203, %v2219
        %v2228 = vmul.f32 %v2204, %v2220
        %v2229 = vmul.f32 %v2205, %v2221
        %v2230 = vmul.f32 %v2206, %v2222
        %v2231 = vmul.f32 %v2207, %v2223
        %v2232 = vmul.f32 %v2208, %v2224
        %v2233 = vmul.f32 %v2209, %v2225
        %v2234 = vmul.f32 %v2171, %v2226
        %v2235 = vmul.f32 %v2173, %v2227
        %v2236 = vmul.f32 %v2175, %v2228
        %v2237 = vmul.f32 %v2177, %v2229
        %v2238 = vmul.f32 %v2179, %v2230
        %v2239 = vmul.f32 %v2181, %v2231
        %v2240 = vmul.f32 %v2183, %v2232
        %v2241 = vmul.f32 %v2185, %v2233
        %2242 = vrot.lane.b32.xlu0 %v543, 32
        %v2243 = vpop.permute.xlu0 %2242
        %2244 = vrot.lane.b32.xlu0 %v548, 32
        %v2245 = vpop.permute.xlu0 %2244
        %2246 = vrot.lane.b32.xlu0 %v553, 32
        %v2247 = vpop.permute.xlu0 %2246
        %2248 = vrot.lane.b32.xlu0 %v558, 32
        %v2249 = vpop.permute.xlu0 %2248
        %2250 = vrot.lane.b32.xlu0 %v563, 32
        %v2251 = vpop.permute.xlu0 %2250
        %2252 = vrot.lane.b32.xlu0 %v568, 32
        %v2253 = vpop.permute.xlu0 %2252
        %2254 = vrot.lane.b32.xlu0 %v573, 32
        %v2255 = vpop.permute.xlu0 %2254
        %2256 = vrot.lane.b32.xlu0 %v578, 32
        %v2257 = vpop.permute.xlu0 %2256
        %2258 = vrot.lane.b32.xlu0 %v583, 32
        %v2259 = vpop.permute.xlu0 %2258
        %2260 = vrot.lane.b32.xlu0 %v588, 32
        %v2261 = vpop.permute.xlu0 %2260
        %2262 = vrot.lane.b32.xlu0 %v593, 32
        %v2263 = vpop.permute.xlu0 %2262
        %2264 = vrot.lane.b32.xlu0 %v598, 32
        %v2265 = vpop.permute.xlu0 %2264
        %2266 = vrot.lane.b32.xlu0 %v603, 32
        %v2267 = vpop.permute.xlu0 %2266
        %2268 = vrot.lane.b32.xlu0 %v608, 32
        %v2269 = vpop.permute.xlu0 %2268
        %2270 = vrot.lane.b32.xlu0 %v613, 32
        %v2271 = vpop.permute.xlu0 %2270
        %2272 = vrot.lane.b32.xlu0 %v618, 32
        %v2273 = vpop.permute.xlu0 %2272
        %2290 = vmatprep.subr.mxu0 0.0
        %2291 = vmatpush1.msra.mxu0 %v2243
        %2292 = vmatprep.subr.mxu0 0.0
        %2293 = vmatpush1.msra.mxu0 %v2245
        %2294 = vmatprep.subr.mxu0 0.0
        %2295 = vmatpush1.msra.mxu0 %v2247
        %2296 = vmatprep.subr.mxu0 0.0
        %2297 = vmatpush1.msra.mxu0 %v2249
        %2298 = vmatprep.subr.mxu0 0.0
        %2299 = vmatpush1.msra.mxu0 %v2251
        %2300 = vmatprep.subr.mxu0 0.0
        %2301 = vmatpush1.msra.mxu0 %v2253
        %2302 = vmatprep.subr.mxu0 0.0
        %2303 = vmatpush1.msra.mxu0 %v2255
        %2304 = vmatprep.subr.mxu0 0.0
        %2305 = vmatpush1.msra.mxu0 %v2257
        %2306 = vmatprep.subr.mxu0 0.0
        %2307 = vmatpush1.msra.mxu0 %v2259
        %2308 = vmatprep.subr.mxu0 0.0
        %2309 = vmatpush1.msra.mxu0 %v2261
        %2310 = vmatprep.subr.mxu0 0.0
        %2311 = vmatpush1.msra.mxu0 %v2263
        %2312 = vmatprep.subr.mxu0 0.0
        %2313 = vmatpush1.msra.mxu0 %v2265
        %2314 = vmatprep.subr.mxu0 0.0
        %2315 = vmatpush1.msra.mxu0 %v2267
        %2316 = vmatprep.subr.mxu0 0.0
        %2317 = vmatpush1.msra.mxu0 %v2269
        %2318 = vmatprep.subr.mxu0 0.0
        %2319 = vmatpush1.msra.mxu0 %v2271
        %2320 = vmatprep.subr.mxu0 0.0
        %2321 = vmatpush1.msra.mxu0 %v2273
        %2322 = vmatprep.subr.mxu0 0.0
        %2323 = vmatpush1.msra.mxu0 0.0
        %2324 = vmatprep.subr.mxu0 0.0
        %2325 = vmatpush1.msra.mxu0 0.0
        %2326 = vmatprep.subr.mxu0 0.0
        %2327 = vmatpush1.msra.mxu0 0.0
        %2328 = vmatprep.subr.mxu0 0.0
        %2329 = vmatpush1.msra.mxu0 0.0
        %2330 = vmatprep.subr.mxu0 0.0
        %2331 = vmatpush1.msra.mxu0 0.0
        %2332 = vmatprep.subr.mxu0 0.0
        %2333 = vmatpush1.msra.mxu0 0.0
        %2334 = vmatprep.subr.mxu0 0.0
        %2335 = vmatpush1.msra.mxu0 0.0
        %2336 = vmatprep.subr.mxu0 0.0
        %2337 = vmatpush1.msra.mxu0 0.0
        %2338 = vmatprep.subr.mxu0 0.0
        %2339 = vmatpush1.msra.mxu0 0.0
        %2340 = vmatprep.subr.mxu0 0.0
        %2341 = vmatpush1.msra.mxu0 0.0
        %2342 = vmatprep.subr.mxu0 0.0
        %2343 = vmatpush1.msra.mxu0 0.0
        %2344 = vmatprep.subr.mxu0 0.0
        %2345 = vmatpush1.msra.mxu0 0.0
        %2346 = vmatprep.subr.mxu0 0.0
        %2347 = vmatpush1.msra.mxu0 0.0
        %2348 = vmatprep.subr.mxu0 0.0
        %2349 = vmatpush1.msra.mxu0 0.0
        %2350 = vmatprep.subr.mxu0 0.0
        %2351 = vmatpush1.msra.mxu0 0.0
        %2352 = vmatprep.subr.mxu0 0.0
        %2353 = vmatpush1.msra.mxu0 0.0
        %2354 = vmatprep.mubr.f32.mxu0 0.0
        %2355 = vmatmul.mubr.f32.gmra.mrb[0].mxu0 %v2234
        %v2356 = vpop.f32.mrb[0].mxu0
        %v2357 = vadd.f32 0.0, %v2356
        %v2358 = vpop.f32.mrb[0].mxu0
        %2359 = vmatprep.mubr.f32.mxu0 0.0
        %2360 = vmatmul.mubr.f32.gmra.mrb[0].mxu0 %v2235
        %v2361 = vpop.f32.mrb[0].mxu0
        %v2362 = vadd.f32 0.0, %v2361
        %v2363 = vpop.f32.mrb[0].mxu0
        %2364 = vmatprep.mubr.f32.mxu0 0.0
        %2365 = vmatmul.mubr.f32.gmra.mrb[0].mxu0 %v2236
        %v2366 = vpop.f32.mrb[0].mxu0
        %v2367 = vadd.f32 0.0, %v2366
        %v2368 = vpop.f32.mrb[0].mxu0
        %2369 = vmatprep.mubr.f32.mxu0 0.0
        %2370 = vmatmul.mubr.f32.gmra.mrb[0].mxu0 %v2237
        %v2371 = vpop.f32.mrb[0].mxu0
        %v2372 = vadd.f32 0.0, %v2371
        %v2373 = vpop.f32.mrb[0].mxu0
        %2374 = vmatprep.mubr.f32.mxu0 0.0
        %2375 = vmatmul.mubr.f32.gmra.mrb[0].mxu0 %v2238
        %v2376 = vpop.f32.mrb[0].mxu0
        %v2377 = vadd.f32 0.0, %v2376
        %v2378 = vpop.f32.mrb[0].mxu0
        %2379 = vmatprep.mubr.f32.mxu0 0.0
        %2380 = vmatmul.mubr.f32.gmra.mrb[0].mxu0 %v2239
        %v2381 = vpop.f32.mrb[0].mxu0
        %v2382 = vadd.f32 0.0, %v2381
        %v2383 = vpop.f32.mrb[0].mxu0
        %2384 = vmatprep.mubr.f32.mxu0 0.0
        %2385 = vmatmul.mubr.f32.gmra.mrb[0].mxu0 %v2240
        %v2386 = vpop.f32.mrb[0].mxu0
        %v2387 = vadd.f32 0.0, %v2386
        %v2388 = vpop.f32.mrb[0].mxu0
        %2389 = vmatprep.mubr.f32.mxu0 0.0
        %2390 = vmatmul.mubr.f32.gmra.mrb[0].mxu0 %v2241
        %v2391 = vpop.f32.mrb[0].mxu0
        %v2392 = vadd.f32 0.0, %v2391
        %v2393 = vpop.f32.mrb[0].mxu0
        %2394 = vdwg.mxu0
        %vm2395 = vcmp.gt.f32.partialorder %v2357, 0.0
        %vm2396 = vcmp.gt.f32.partialorder %v2362, 0.0
        %vm2397 = vcmp.gt.f32.partialorder %v2367, 0.0
        %vm2398 = vcmp.gt.f32.partialorder %v2372, 0.0
        %vm2399 = vcmp.gt.f32.partialorder %v2377, 0.0
        %vm2400 = vcmp.gt.f32.partialorder %v2382, 0.0
        %vm2401 = vcmp.gt.f32.partialorder %v2387, 0.0
        %vm2402 = vcmp.gt.f32.partialorder %v2392, 0.0
        %v2403 = vmin.f32 %v2357, 0.0
        %v2404 = vmin.f32 %v2362, 0.0
        %v2405 = vmin.f32 %v2367, 0.0
        %v2406 = vmin.f32 %v2372, 0.0
        %v2407 = vmin.f32 %v2377, 0.0
        %v2408 = vmin.f32 %v2382, 0.0
        %v2409 = vmin.f32 %v2387, 0.0
        %v2410 = vmin.f32 %v2392, 0.0
        %v2411 = vmul.f32 %v2403, 1.442695
        %v2412 = vpow.pop %v2411
        %v2413 = vmul.f32 %v2404, 1.442695
        %v2414 = vpow.pop %v2413
        %v2415 = vmul.f32 %v2405, 1.442695
        %v2416 = vpow.pop %v2415
        %v2417 = vmul.f32 %v2406, 1.442695
        %v2418 = vpow.pop %v2417
        %v2419 = vmul.f32 %v2407, 1.442695
        %v2420 = vpow.pop %v2419
        %v2421 = vmul.f32 %v2408, 1.442695
        %v2422 = vpow.pop %v2421
        %v2423 = vmul.f32 %v2409, 1.442695
        %v2424 = vpow.pop %v2423
        %v2425 = vmul.f32 %v2410, 1.442695
        %v2426 = vpow.pop %v2425
        %v2427 = vsub.f32 %v2412, 1.0
        %v2428 = vsub.f32 %v2414, 1.0
        %v2429 = vsub.f32 %v2416, 1.0
        %v2430 = vsub.f32 %v2418, 1.0
        %v2431 = vsub.f32 %v2420, 1.0
        %v2432 = vsub.f32 %v2422, 1.0
        %v2433 = vsub.f32 %v2424, 1.0
        %v2434 = vsub.f32 %v2426, 1.0
        %v2435 = vsel %vm2395, %v2357, %v2427
        %v2436 = vsel %vm2396, %v2362, %v2428
        %v2437 = vsel %vm2397, %v2367, %v2429
        %v2438 = vsel %vm2398, %v2372, %v2430
        %v2439 = vsel %vm2399, %v2377, %v2431
        %v2440 = vsel %vm2400, %v2382, %v2432
        %v2441 = vsel %vm2401, %v2387, %v2433
        %v2442 = vsel %vm2402, %v2392, %v2434
        %2451 = vrot.lane.b32.xlu0 %v1689, 32
        %v2452 = vpop.permute.xlu0 %2451
        %2453 = vrot.lane.b32.xlu0 %v1690, 32
        %v2454 = vpop.permute.xlu0 %2453
        %2455 = vrot.lane.b32.xlu0 %v1691, 32
        %v2456 = vpop.permute.xlu0 %2455
        %2457 = vrot.lane.b32.xlu0 %v1692, 32
        %v2458 = vpop.permute.xlu0 %2457
        %2459 = vrot.lane.b32.xlu0 %v1693, 32
        %v2460 = vpop.permute.xlu0 %2459
        %2461 = vrot.lane.b32.xlu0 %v1694, 32
        %v2462 = vpop.permute.xlu0 %2461
        %2463 = vrot.lane.b32.xlu0 %v1695, 32
        %v2464 = vpop.permute.xlu0 %2463
        %2465 = vrot.lane.b32.xlu0 %v1696, 32
        %v2466 = vpop.permute.xlu0 %2465
        %2483 = vrot.lane.b32.xlu0 %v2062, 64
        %v2484 = vpop.permute.xlu0 %2483
        %2485 = vrot.lane.b32.xlu0 %v2063, 64
        %v2486 = vpop.permute.xlu0 %2485
        %2487 = vrot.lane.b32.xlu0 %v2064, 64
        %v2488 = vpop.permute.xlu0 %2487
        %2489 = vrot.lane.b32.xlu0 %v2065, 64
        %v2490 = vpop.permute.xlu0 %2489
        %2491 = vrot.lane.b32.xlu0 %v2066, 64
        %v2492 = vpop.permute.xlu0 %2491
        %2493 = vrot.lane.b32.xlu0 %v2067, 64
        %v2494 = vpop.permute.xlu0 %2493
        %2495 = vrot.lane.b32.xlu0 %v2068, 64
        %v2496 = vpop.permute.xlu0 %2495
        %2497 = vrot.lane.b32.xlu0 %v2069, 64
        %v2498 = vpop.permute.xlu0 %2497
        %2515 = vrot.lane.b32.xlu0 %v2435, 96
        %v2516 = vpop.permute.xlu0 %2515
        %2517 = vrot.lane.b32.xlu0 %v2436, 96
        %v2518 = vpop.permute.xlu0 %2517
        %2519 = vrot.lane.b32.xlu0 %v2437, 96
        %v2520 = vpop.permute.xlu0 %2519
        %2521 = vrot.lane.b32.xlu0 %v2438, 96
        %v2522 = vpop.permute.xlu0 %2521
        %2523 = vrot.lane.b32.xlu0 %v2439, 96
        %v2524 = vpop.permute.xlu0 %2523
        %2525 = vrot.lane.b32.xlu0 %v2440, 96
        %v2526 = vpop.permute.xlu0 %2525
        %2527 = vrot.lane.b32.xlu0 %v2441, 96
        %v2528 = vpop.permute.xlu0 %2527
        %2529 = vrot.lane.b32.xlu0 %v2442, 96
        %v2530 = vpop.permute.xlu0 %2529
        %vm2539 = vcmask 261120
        %v2540 = vsel %vm2539, %v1300, %v2452
        %v2541 = vsel %vm2539, %v1301, %v2454
        %v2542 = vsel %vm2539, %v1302, %v2456
        %v2543 = vsel %vm2539, %v1303, %v2458
        %v2544 = vsel %vm2539, %v1304, %v2460
        %v2545 = vsel %vm2539, %v1305, %v2462
        %v2546 = vsel %vm2539, %v1306, %v2464
        %v2547 = vsel %vm2539, %v1307, %v2466
        %vm2548 = vcmask 523264
        %v2549 = vsel %vm2548, %v2540, %v2484
        %v2550 = vsel %vm2548, %v2541, %v2486
        %v2551 = vsel %vm2548, %v2542, %v2488
        %v2552 = vsel %vm2548, %v2543, %v2490
        %v2553 = vsel %vm2548, %v2544, %v2492
        %v2554 = vsel %vm2548, %v2545, %v2494
        %v2555 = vsel %vm2548, %v2546, %v2496
        %v2556 = vsel %vm2548, %v2547, %v2498
        %vm2557 = vcmask 785408
        %v2558 = vsel %vm2557, %v2549, %v2516
        %v2559 = vsel %vm2557, %v2550, %v2518
        %v2560 = vsel %vm2557, %v2551, %v2520
        %v2561 = vsel %vm2557, %v2552, %v2522
        %v2562 = vsel %vm2557, %v2553, %v2524
        %v2563 = vsel %vm2557, %v2554, %v2526
        %v2564 = vsel %vm2557, %v2555, %v2528
        %v2565 = vsel %vm2557, %v2556, %v2530
        %2566 = vst [vmem:[%s234] sm:$0xff] %v2558
        %2567 = vst [vmem:[%s234 + $0x8] sm:$0xff] %v2559
        %2568 = vst [vmem:[%s234 + $0x10] sm:$0xff] %v2560
        %2569 = vst [vmem:[%s234 + $0x18] sm:$0xff] %v2561
        %2570 = vst [vmem:[%s234 + $0x20] sm:$0xff] %v2562
        %2571 = vst [vmem:[%s234 + $0x28] sm:$0xff] %v2563
        %2572 = vst [vmem:[%s234 + $0x30] sm:$0xff] %v2564
        %2573 = vst [vmem:[%s234 + $0x38] sm:$0xff] %v2565
        %s2574 = sand.u32 %s142, 1
        %s2575 = scalar_lea.sflag [#allocation3], %s2574
        %s2576 = sand.u32 %s142, 1
        %s2577 = smul.addr %s2576, 64
        %s2578 = scalar_lea.vmem [#allocation2], %s2577
        // Predicated region
        $region41: #{tpu_custom_call.1} parent=39 // pred_check
          %p2579 = pneg %p152
        $region42: #{tpu_custom_call.1} parent=39 // pred_check_branch
          %2581 = sbr.rel (%p2579) target = $region44
        $region43: #{tpu_custom_call.1} parent=39 // pred_region
          %s2582 = smul.u32 8, %s19
          %s2584 = ssub.s32 1024, 1024
          %2585 = vsyncadd %s2575, %s2584
          %s2586 = smul.addr %s2582, 128
          %s2587 = scalar_lea.hbm %s5, %s2586
          %s2588 = sshll.u32 %s2578, 4
          %s2589 = int_to_ptr.vmem [resolvable:$true] %s2588
          %2594 = dma.vmem_to_hbm [thread:$0]  %s2589, 1024, %s2587, %s2575, 128, 128, 8
        $region44: #{tpu_custom_call.1} parent=39 // pred_fallthru
          _
      $region40: #{tpu_custom_call.1} parent=5 // pred_fallthru
        _
      %p2595 = scmp.le.s32.totalorder 2, %s14
      // Predicated region
      $region45: #{tpu_custom_call.1} parent=5 // pred_check
        %p2596 = pneg %p2595
      $region46: #{tpu_custom_call.1} parent=5 // pred_check_branch
        %2598 = sbr.rel (%p2596) target = $region48
      $region47: #{tpu_custom_call.1} parent=5 // pred_region
        %s2599 = ssub.s32 %s14, 2
        // Predicated region
        $region49: #{tpu_custom_call.1} parent=47 // pred_check
          %p2600 = pneg %p158
        $region50: #{tpu_custom_call.1} parent=47 // pred_check_branch
          %2602 = sbr.rel (%p2600) target = $region52
        $region51: #{tpu_custom_call.1} parent=47 // pred_region
          %s2603 = sand.u32 %s143, 1
          %s2604 = scalar_lea.sflag [#allocation3], %s2603
          %s2605 = sand.u32 %s143, 1
          %s2606 = smul.addr %s2605, 64
          %s2607 = scalar_lea.vmem [#allocation2], %s2606
          %2608 = dma.done %s2604, 1024
        $region52: #{tpu_custom_call.1} parent=47 // pred_fallthru
          _
      $region48: #{tpu_custom_call.1} parent=5 // pred_fallthru
        _
    $region6: #{tpu_custom_call.1} parent=1 // loop_footer
      %s18 = sadd.s32 1, %s14
    $region7: #{tpu_custom_call.1} parent=1 // loop_footer_branch
      %13 = sbr.rel target = $region3
    $region8: #{tpu_custom_call.1} parent=1 // loop_exit
      _
    %2609 = vsyncpa [#allocation3], 1
    %s2610 = scalar_lea.sflag [#allocation3], 1
    %2611 = vsyncpa %s2610, 1

</llo_original>
